<compile_context>
chip_gen: v6e
topology: v6e:2x2x1
jax: 0.10.0
libtpu: 0.0.40
codegen_flags: <defaults>
</compile_context>

<pallas_src>
import functools

import numpy as np
import jax
import jax.numpy as jnp
from jax.experimental import pallas as pl
from jax.experimental.pallas import tpu as pltpu

D_MODEL = 32
D_FF = 64
KERNEL_SIZE = 25
LN_EPS = 1e-5


# ---------------------------- fused kernel ----------------------------

def encoder_layer_kernel(x_ref, avg_ref, pw_ref, w1_ref, w2_ref,
                         segm_ref, misc_ref,
                         out_ref, trend_ref, *, d_model, d_ff, b_tile):
    """Processes B_TILE batch elements in a lane-packed (L, B_TILE*D) layout.

    Column index of every (L, B_TILE*D) array is b*D + d  (batch-major lanes).
    """
    f32 = jnp.float32
    bf16 = jnp.bfloat16

    x = x_ref[...]                         # (L, BD) float32
    L = x.shape[0]
    BD = b_tile * d_model
    BF = b_tile * d_ff

    # --- SeriesDecomposition: AvgPool1d(k, stride=1, pad=k//2, zero-pad) ---
    # expressed as one small f32 MXU matmul against the banded averaging
    # matrix (kept in f32: trend is a direct output and feeds everything).
    trend = jnp.dot(avg_ref[...], x, preferred_element_type=f32)     # (L, BD)
    seasonal = x - trend
    trend_ref[...] = trend                 # lane-dense store (last dim = BD)

    # --- AutoCorrelation (circular, q == k) ---
    # corr[t, c] = sum_s S[(s+t)%L, c] * S[s, c]
    # Fused roll -> multiply -> sublane-reduce; symmetry corr[t] == corr[L-t]
    # means only t = 0 .. L//2 shifts are computed, the rest are mirrored via
    # an iota row-select (no (L, L, D) intermediate is ever materialized).
    row_ids = jax.lax.broadcasted_iota(jnp.int32, (L, 1), 0)
    corr = jnp.zeros_like(seasonal)
    for t in range(L // 2 + 1):
        rolled = seasonal if t == 0 else pltpu.roll(seasonal, shift=t, axis=0)
        row = jnp.sum(rolled * seasonal, axis=0, keepdims=True)       # (1, BD)
        hit = (row_ids == t) | (row_ids == (L - t) % L)               # (L, 1)
        corr = corr + jnp.where(hit, row, 0.0)

    # --- softmax over the feature axis (per batch segment of D lanes) ---
    # Subtracting the full-row max is exact: it is constant within every
    # D-lane segment, and keeps exp arguments <= 0 for stability.
    m = jnp.max(corr, axis=-1, keepdims=True)
    e = jnp.exp(corr - m)
    mean_e = jnp.dot(e, segm_ref[...], preferred_element_type=f32)    # seg-mean
    inv = pl.reciprocal(mean_e, approx=True) * (1.0 / d_model)
    res = seasonal * e * inv

    # Packed small parameters (lane-tiled per batch segment in the wrapper).
    misc = misc_ref[...]
    proj_b = misc[0:1, 0:BD]
    ff1_b = misc[1:2, 0:BF]
    ff2_b = misc[2:3, 0:BD]
    ln1_g, ln1_b = misc[3:4, 0:BD], misc[4:5, 0:BD]
    ln2_g, ln2_b = misc[5:6, 0:BD], misc[6:7, 0:BD]

    def layer_norm(v, g, b):
        # segment mean / variance via the block-diagonal segm matrix (f32 MXU)
        mu = jnp.dot(v, segm_ref[...], preferred_element_type=f32)
        vc = v - mu
        var = jnp.dot(vc * vc, segm_ref[...], preferred_element_type=f32)
        return vc * jax.lax.rsqrt(var + LN_EPS) * g + b

    # --- projection + residual + LayerNorm1 (block-diag weight, bf16 MXU) ---
    proj = jnp.dot(res.astype(bf16), pw_ref[...],
                   preferred_element_type=f32) + proj_b
    h = layer_norm(seasonal + proj, ln1_g, ln1_b)

    # --- FFN (Linear -> ReLU -> Linear) + residual + LayerNorm2 ---
    f = jnp.dot(h.astype(bf16), w1_ref[...], preferred_element_type=f32) + ff1_b
    f = jnp.maximum(f, 0.0)
    f = jnp.dot(f.astype(bf16), w2_ref[...], preferred_element_type=f32) + ff2_b
    out_ref[...] = layer_norm(h + f, ln2_g, ln2_b)     # lane-dense store


# ---------------------------- wrapper ----------------------------

def _avg_matrix(L, kernel_size):
    # Banded (L, L) matrix implementing AvgPool1d(kernel, stride=1,
    # padding=kernel//2, count_include_pad=True): trend = A @ x.
    p = kernel_size // 2
    idx = np.arange(L)
    band = (np.abs(idx[:, None] - idx[None, :]) <= p).astype(np.float32)
    return jnp.asarray(band / float(kernel_size))


def _pack_misc(params, b_tile, d_model, d_ff):
    BD, BF = b_tile * d_model, b_tile * d_ff
    width = max(BD, BF)

    def row(v):
        r = jnp.tile(jnp.reshape(v, (-1,)), (b_tile,))
        return jnp.pad(r, (0, width - r.shape[0]))

    rows = [row(params["proj_b"]), row(params["ff1_b"]), row(params["ff2_b"]),
            row(params["ln1_g"]), row(params["ln1_b"]),
            row(params["ln2_g"]), row(params["ln2_b"]),
            jnp.zeros((width,), jnp.float32)]
    return jnp.stack(rows, axis=0)                       # (8, width)


def encoder_layer_forward(x, params, *, b_tile=None):
    B, L, D = x.shape
    d_ff = params["ff1_w"].shape[1]

    # Batch tile: fold batch onto lanes so the lane dim is a multiple of 128.
    if b_tile is None:
        b_tile = max(1, 128 // D) if D <= 128 else 1
    while (b_tile * D) % 128 != 0 and b_tile < B:
        b_tile += 1
    Bp = -(-B // b_tile) * b_tile
    if Bp != B:
        x = jnp.pad(x, ((0, Bp - B), (0, 0), (0, 0)))

    BD, BF = b_tile * D, b_tile * d_ff

    # Lane-packed input: (L, Bp*D), column index = b*D + d.
    x_packed = jnp.transpose(x, (1, 0, 2)).reshape(L, Bp * D)

    # Constant operands.
    avg = _avg_matrix(L, KERNEL_SIZE)
    eye = jnp.eye(b_tile, dtype=jnp.float32)
    pw_bd = jnp.kron(eye, params["proj_w"]).astype(jnp.bfloat16)   # (BD, BD)
    w1_bd = jnp.kron(eye, params["ff1_w"]).astype(jnp.bfloat16)    # (BD, BF)
    w2_bd = jnp.kron(eye, params["ff2_w"]).astype(jnp.bfloat16)    # (BF, BD)
    segm = jnp.kron(eye, jnp.full((D, D), 1.0 / D, jnp.float32))   # (BD, BD)
    misc = _pack_misc(params, b_tile, D, d_ff)                     # (8, max)

    def const_spec(shape):
        return pl.BlockSpec(shape, lambda i: (0, 0))

    io_spec = pl.BlockSpec((L, BD), lambda i: (0, i))

    grid_spec = pltpu.PrefetchScalarGridSpec(
        num_scalar_prefetch=0,
        grid=(Bp // b_tile,),
        in_specs=[
            io_spec,                       # x (lane packed)
            const_spec((L, L)),            # averaging matrix
            const_spec((BD, BD)),          # block-diag projection weight
            const_spec((BD, BF)),          # block-diag ff1 weight
            const_spec((BF, BD)),          # block-diag ff2 weight
            const_spec((BD, BD)),          # block-diag segment-mean matrix
            const_spec(misc.shape),        # packed biases / LN params
        ],
        out_specs=(io_spec, io_spec),
    )

    kernel = functools.partial(encoder_layer_kernel,
                               d_model=D, d_ff=d_ff, b_tile=b_tile)

    out_p, trend_p = pl.pallas_call(
        kernel,
        out_shape=(jax.ShapeDtypeStruct((L, Bp * D), jnp.float32),   # x_out
                   jax.ShapeDtypeStruct((L, Bp * D), jnp.float32)),  # trend
        grid_spec=grid_spec,
        compiler_params=pltpu.CompilerParams(
            dimension_semantics=("parallel",)),
    )(x_packed, avg, pw_bd, w1_bd, w2_bd, segm, misc)

    out = out_p.reshape(L, Bp, D).transpose(1, 0, 2)[:B]
    trend = trend_p.reshape(L, Bp, D).transpose(1, 0, 2)[:B]
    return out, trend


# ------------------- pure-JAX reference (for verification) -------------------

def encoder_layer_ref(x, p):
    B, L, D = x.shape
    pad = KERNEL_SIZE // 2
    xpad = jnp.pad(x, ((0, 0), (pad, pad), (0, 0)))
    windows = jnp.stack([xpad[:, k:k + L, :] for k in range(KERNEL_SIZE)], 0)
    trend = jnp.mean(windows, axis=0)
    seasonal = x - trend

    sf = jnp.fft.rfft(seasonal, axis=1)
    corr = jnp.fft.irfft(sf * jnp.conj(sf), n=L, axis=1)
    res = seasonal * jax.nn.softmax(corr, axis=-1)

    def ln(v, g, b):
        mu = jnp.mean(v, axis=-1, keepdims=True)
        var = jnp.mean((v - mu) ** 2, axis=-1, keepdims=True)
        return (v - mu) / jnp.sqrt(var + LN_EPS) * g + b

    h = ln(seasonal + res @ p["proj_w"] + p["proj_b"], p["ln1_g"], p["ln1_b"])
    f = jnp.maximum(h @ p["ff1_w"] + p["ff1_b"], 0.0) @ p["ff2_w"] + p["ff2_b"]
    out = ln(h + f, p["ln2_g"], p["ln2_b"])
    return out, trend


# ---------------------------- deterministic parameter init ----------------------------

def _linear_init(key, fan_in, fan_out):
    kw, kb = jax.random.split(key)
    bound = 1.0 / np.sqrt(fan_in)
    w = jax.random.uniform(kw, (fan_in, fan_out), jnp.float32, -bound, bound)
    b = jax.random.uniform(kb, (1, fan_out), jnp.float32, -bound, bound)
    return w, b


def init_params(key, d_model, d_ff):
    ks = jax.random.split(key, 3)
    p = {}
    p["proj_w"], p["proj_b"] = _linear_init(ks[0], d_model, d_model)
    p["ff1_w"], p["ff1_b"] = _linear_init(ks[1], d_model, d_ff)
    p["ff2_w"], p["ff2_b"] = _linear_init(ks[2], d_ff, d_model)
    for name in ("ln1", "ln2"):
        p[name + "_g"] = jnp.ones((1, d_model), jnp.float32)
        p[name + "_b"] = jnp.zeros((1, d_model), jnp.float32)
    return p


if __name__ == "__main__":
    B, L = 8, 16            # B_TILE=4 -> 2 grid steps, 128-lane packed blocks
    root = jax.random.PRNGKey(0)
    kx, kp = jax.random.split(root)
    x = jax.random.normal(kx, (B, L, D_MODEL), jnp.float32)
    params = init_params(kp, D_MODEL, D_FF)

    fwd = jax.jit(encoder_layer_forward)
    out, trend = fwd(x, params)
    jax.block_until_ready((out, trend))

    assert out.shape == (B, L, D_MODEL), out.shape
    assert trend.shape == (B, L, D_MODEL), trend.shape
    assert bool(jnp.all(jnp.isfinite(out))) and bool(jnp.all(jnp.isfinite(trend)))

    out_r, trend_r = encoder_layer_ref(x, params)
    err = max(float(jnp.max(jnp.abs(out - out_r))),
              float(jnp.max(jnp.abs(trend - trend_r))))
    assert err < 5e-2, f"mismatch vs pure-JAX reference: {err}"

    print("KERNEL_OK")
</pallas_src>

<mosaic_0001>
module attributes {stable_mosaic.version = 11 : i64} {
  func.func @encoder_layer_kernel(%arg0: i32, %arg1: memref<16x128xf32, #tpu.memory_space<vmem>>, %arg2: memref<16x16xf32, #tpu.memory_space<vmem>>, %arg3: memref<128x128xbf16, #tpu.memory_space<vmem>>, %arg4: memref<128x256xbf16, #tpu.memory_space<vmem>>, %arg5: memref<256x128xbf16, #tpu.memory_space<vmem>>, %arg6: memref<128x128xf32, #tpu.memory_space<vmem>>, %arg7: memref<8x256xf32, #tpu.memory_space<vmem>>, %arg8: memref<16x128xf32, #tpu.memory_space<vmem>>, %arg9: memref<16x128xf32, #tpu.memory_space<vmem>>) attributes {dimension_semantics = [#tpu.dimension_semantics<parallel>], iteration_bounds = array<i64: 2>, scalar_prefetch = 0 : i64, scratch_operands = 0 : i64, tpu.core_type = #tpu.core_type<tc>, window_params = [{transform_indices = @transform_0, window_bounds = array<i64: 16, 128>}, {pipeline_mode = #tpu.pipeline_mode<synchronous>, transform_indices = @transform_1, window_bounds = array<i64: 16, 16>}, {pipeline_mode = #tpu.pipeline_mode<synchronous>, transform_indices = @transform_2, window_bounds = array<i64: 128, 128>}, {pipeline_mode = #tpu.pipeline_mode<synchronous>, transform_indices = @transform_3, window_bounds = array<i64: 128, 256>}, {pipeline_mode = #tpu.pipeline_mode<synchronous>, transform_indices = @transform_4, window_bounds = array<i64: 256, 128>}, {pipeline_mode = #tpu.pipeline_mode<synchronous>, transform_indices = @transform_5, window_bounds = array<i64: 128, 128>}, {pipeline_mode = #tpu.pipeline_mode<synchronous>, transform_indices = @transform_6, window_bounds = array<i64: 8, 256>}, {transform_indices = @transform_7, window_bounds = array<i64: 16, 128>}, {transform_indices = @transform_8, window_bounds = array<i64: 16, 128>}]} {
    %c0 = arith.constant 0 : index
    %c0_0 = arith.constant 0 : index
    %0 = vector.load %arg1[%c0, %c0_0] : memref<16x128xf32, #tpu.memory_space<vmem>>, vector<16x128xf32>
    %c0_1 = arith.constant 0 : index
    %c0_2 = arith.constant 0 : index
    %1 = vector.load %arg2[%c0_1, %c0_2] : memref<16x16xf32, #tpu.memory_space<vmem>>, vector<16x16xf32>
    %cst = arith.constant dense<0.000000e+00> : vector<16x128xf32>
    %2 = tpu.matmul %1, %0, %cst {dimension_numbers = #tpu.dot_dimension_numbers<[1], [0], [0], [1], [0, 0, 1, 1], [], []>} : vector<16x16xf32>, vector<16x128xf32>, vector<16x128xf32> -> vector<16x128xf32>
    %3 = arith.subf %0, %2 : vector<16x128xf32>
    %c0_3 = arith.constant 0 : index
    %c0_4 = arith.constant 0 : index
    %4 = vector.load %arg9[%c0_3, %c0_4] : memref<16x128xf32, #tpu.memory_space<vmem>>, vector<16x128xf32>
    tpu.vector_store %arg9[%c0_3, %c0_4], %2 {strides = array<i32>} : memref<16x128xf32, #tpu.memory_space<vmem>>, vector<16x128xf32>,
    %5 = tpu.iota {dimensions = array<i32: 0>} : vector<16x1xi32>
    %cst_5 = arith.constant 0.000000e+00 : f32
    %6 = vector.broadcast %cst_5 : f32 to vector<16x128xf32>
    %7 = arith.mulf %3, %3 : vector<16x128xf32>
    %cst_6 = arith.constant dense<0.000000e+00> : vector<128xf32>
    %8 = vector.multi_reduction <add>, %7, %cst_6 [0] : vector<16x128xf32> to vector<128xf32>
    %9 = vector.shape_cast %8 : vector<128xf32> to vector<1x128xf32>
    %c0_i32 = arith.constant 0 : i32
    %10 = vector.broadcast %c0_i32 : i32 to vector<16x1xi32>
    %11 = arith.cmpi eq, %5, %10 : vector<16x1xi32>
    %c0_i32_7 = arith.constant 0 : i32
    %12 = vector.broadcast %c0_i32_7 : i32 to vector<16x1xi32>
    %13 = arith.cmpi eq, %5, %12 : vector<16x1xi32>
    %14 = arith.ori %11, %13 : vector<16x1xi1>
    %cst_8 = arith.constant 0.000000e+00 : f32
    %15 = vector.shape_cast %14 : vector<16x1xi1> to vector<16x1xi1>
    %16 = vector.broadcast %15 : vector<16x1xi1> to vector<16x128xi1>
    %17 = vector.shape_cast %9 : vector<1x128xf32> to vector<1x128xf32>
    %18 = vector.broadcast %17 : vector<1x128xf32> to vector<16x128xf32>
    %19 = vector.broadcast %cst_8 : f32 to vector<16x128xf32>
    %20 = arith.select %16, %18, %19 : vector<16x128xi1>, vector<16x128xf32>
    %21 = arith.addf %6, %20 : vector<16x128xf32>
    %c1_i32 = arith.constant 1 : i32
    %22 = tpu.dynamic_rotate %3 by %c1_i32 dim 0 : vector<16x128xf32>, i32 -> vector<16x128xf32>
    %23 = arith.mulf %22, %3 : vector<16x128xf32>
    %cst_9 = arith.constant dense<0.000000e+00> : vector<128xf32>
    %24 = vector.multi_reduction <add>, %23, %cst_9 [0] : vector<16x128xf32> to vector<128xf32>
    %25 = vector.shape_cast %24 : vector<128xf32> to vector<1x128xf32>
    %c1_i32_10 = arith.constant 1 : i32
    %26 = vector.broadcast %c1_i32_10 : i32 to vector<16x1xi32>
    %27 = arith.cmpi eq, %5, %26 : vector<16x1xi32>
    %c15_i32 = arith.constant 15 : i32
    %28 = vector.broadcast %c15_i32 : i32 to vector<16x1xi32>
    %29 = arith.cmpi eq, %5, %28 : vector<16x1xi32>
    %30 = arith.ori %27, %29 : vector<16x1xi1>
    %cst_11 = arith.constant 0.000000e+00 : f32
    %31 = vector.shape_cast %30 : vector<16x1xi1> to vector<16x1xi1>
    %32 = vector.broadcast %31 : vector<16x1xi1> to vector<16x128xi1>
    %33 = vector.shape_cast %25 : vector<1x128xf32> to vector<1x128xf32>
    %34 = vector.broadcast %33 : vector<1x128xf32> to vector<16x128xf32>
    %35 = vector.broadcast %cst_11 : f32 to vector<16x128xf32>
    %36 = arith.select %32, %34, %35 : vector<16x128xi1>, vector<16x128xf32>
    %37 = arith.addf %21, %36 : vector<16x128xf32>
    %c2_i32 = arith.constant 2 : i32
    %38 = tpu.dynamic_rotate %3 by %c2_i32 dim 0 : vector<16x128xf32>, i32 -> vector<16x128xf32>
    %39 = arith.mulf %38, %3 : vector<16x128xf32>
    %cst_12 = arith.constant dense<0.000000e+00> : vector<128xf32>
    %40 = vector.multi_reduction <add>, %39, %cst_12 [0] : vector<16x128xf32> to vector<128xf32>
    %41 = vector.shape_cast %40 : vector<128xf32> to vector<1x128xf32>
    %c2_i32_13 = arith.constant 2 : i32
    %42 = vector.broadcast %c2_i32_13 : i32 to vector<16x1xi32>
    %43 = arith.cmpi eq, %5, %42 : vector<16x1xi32>
    %c14_i32 = arith.constant 14 : i32
    %44 = vector.broadcast %c14_i32 : i32 to vector<16x1xi32>
    %45 = arith.cmpi eq, %5, %44 : vector<16x1xi32>
    %46 = arith.ori %43, %45 : vector<16x1xi1>
    %cst_14 = arith.constant 0.000000e+00 : f32
    %47 = vector.shape_cast %46 : vector<16x1xi1> to vector<16x1xi1>
    %48 = vector.broadcast %47 : vector<16x1xi1> to vector<16x128xi1>
    %49 = vector.shape_cast %41 : vector<1x128xf32> to vector<1x128xf32>
    %50 = vector.broadcast %49 : vector<1x128xf32> to vector<16x128xf32>
    %51 = vector.broadcast %cst_14 : f32 to vector<16x128xf32>
    %52 = arith.select %48, %50, %51 : vector<16x128xi1>, vector<16x128xf32>
    %53 = arith.addf %37, %52 : vector<16x128xf32>
    %c3_i32 = arith.constant 3 : i32
    %54 = tpu.dynamic_rotate %3 by %c3_i32 dim 0 : vector<16x128xf32>, i32 -> vector<16x128xf32>
    %55 = arith.mulf %54, %3 : vector<16x128xf32>
    %cst_15 = arith.constant dense<0.000000e+00> : vector<128xf32>
    %56 = vector.multi_reduction <add>, %55, %cst_15 [0] : vector<16x128xf32> to vector<128xf32>
    %57 = vector.shape_cast %56 : vector<128xf32> to vector<1x128xf32>
    %c3_i32_16 = arith.constant 3 : i32
    %58 = vector.broadcast %c3_i32_16 : i32 to vector<16x1xi32>
    %59 = arith.cmpi eq, %5, %58 : vector<16x1xi32>
    %c13_i32 = arith.constant 13 : i32
    %60 = vector.broadcast %c13_i32 : i32 to vector<16x1xi32>
    %61 = arith.cmpi eq, %5, %60 : vector<16x1xi32>
    %62 = arith.ori %59, %61 : vector<16x1xi1>
    %cst_17 = arith.constant 0.000000e+00 : f32
    %63 = vector.shape_cast %62 : vector<16x1xi1> to vector<16x1xi1>
    %64 = vector.broadcast %63 : vector<16x1xi1> to vector<16x128xi1>
    %65 = vector.shape_cast %57 : vector<1x128xf32> to vector<1x128xf32>
    %66 = vector.broadcast %65 : vector<1x128xf32> to vector<16x128xf32>
    %67 = vector.broadcast %cst_17 : f32 to vector<16x128xf32>
    %68 = arith.select %64, %66, %67 : vector<16x128xi1>, vector<16x128xf32>
    %69 = arith.addf %53, %68 : vector<16x128xf32>
    %c4_i32 = arith.constant 4 : i32
    %70 = tpu.dynamic_rotate %3 by %c4_i32 dim 0 : vector<16x128xf32>, i32 -> vector<16x128xf32>
    %71 = arith.mulf %70, %3 : vector<16x128xf32>
    %cst_18 = arith.constant dense<0.000000e+00> : vector<128xf32>
    %72 = vector.multi_reduction <add>, %71, %cst_18 [0] : vector<16x128xf32> to vector<128xf32>
    %73 = vector.shape_cast %72 : vector<128xf32> to vector<1x128xf32>
    %c4_i32_19 = arith.constant 4 : i32
    %74 = vector.broadcast %c4_i32_19 : i32 to vector<16x1xi32>
    %75 = arith.cmpi eq, %5, %74 : vector<16x1xi32>
    %c12_i32 = arith.constant 12 : i32
    %76 = vector.broadcast %c12_i32 : i32 to vector<16x1xi32>
    %77 = arith.cmpi eq, %5, %76 : vector<16x1xi32>
    %78 = arith.ori %75, %77 : vector<16x1xi1>
    %cst_20 = arith.constant 0.000000e+00 : f32
    %79 = vector.shape_cast %78 : vector<16x1xi1> to vector<16x1xi1>
    %80 = vector.broadcast %79 : vector<16x1xi1> to vector<16x128xi1>
    %81 = vector.shape_cast %73 : vector<1x128xf32> to vector<1x128xf32>
    %82 = vector.broadcast %81 : vector<1x128xf32> to vector<16x128xf32>
    %83 = vector.broadcast %cst_20 : f32 to vector<16x128xf32>
    %84 = arith.select %80, %82, %83 : vector<16x128xi1>, vector<16x128xf32>
    %85 = arith.addf %69, %84 : vector<16x128xf32>
    %c5_i32 = arith.constant 5 : i32
    %86 = tpu.dynamic_rotate %3 by %c5_i32 dim 0 : vector<16x128xf32>, i32 -> vector<16x128xf32>
    %87 = arith.mulf %86, %3 : vector<16x128xf32>
    %cst_21 = arith.constant dense<0.000000e+00> : vector<128xf32>
    %88 = vector.multi_reduction <add>, %87, %cst_21 [0] : vector<16x128xf32> to vector<128xf32>
    %89 = vector.shape_cast %88 : vector<128xf32> to vector<1x128xf32>
    %c5_i32_22 = arith.constant 5 : i32
    %90 = vector.broadcast %c5_i32_22 : i32 to vector<16x1xi32>
    %91 = arith.cmpi eq, %5, %90 : vector<16x1xi32>
    %c11_i32 = arith.constant 11 : i32
    %92 = vector.broadcast %c11_i32 : i32 to vector<16x1xi32>
    %93 = arith.cmpi eq, %5, %92 : vector<16x1xi32>
    %94 = arith.ori %91, %93 : vector<16x1xi1>
    %cst_23 = arith.constant 0.000000e+00 : f32
    %95 = vector.shape_cast %94 : vector<16x1xi1> to vector<16x1xi1>
    %96 = vector.broadcast %95 : vector<16x1xi1> to vector<16x128xi1>
    %97 = vector.shape_cast %89 : vector<1x128xf32> to vector<1x128xf32>
    %98 = vector.broadcast %97 : vector<1x128xf32> to vector<16x128xf32>
    %99 = vector.broadcast %cst_23 : f32 to vector<16x128xf32>
    %100 = arith.select %96, %98, %99 : vector<16x128xi1>, vector<16x128xf32>
    %101 = arith.addf %85, %100 : vector<16x128xf32>
    %c6_i32 = arith.constant 6 : i32
    %102 = tpu.dynamic_rotate %3 by %c6_i32 dim 0 : vector<16x128xf32>, i32 -> vector<16x128xf32>
    %103 = arith.mulf %102, %3 : vector<16x128xf32>
    %cst_24 = arith.constant dense<0.000000e+00> : vector<128xf32>
    %104 = vector.multi_reduction <add>, %103, %cst_24 [0] : vector<16x128xf32> to vector<128xf32>
    %105 = vector.shape_cast %104 : vector<128xf32> to vector<1x128xf32>
    %c6_i32_25 = arith.constant 6 : i32
    %106 = vector.broadcast %c6_i32_25 : i32 to vector<16x1xi32>
    %107 = arith.cmpi eq, %5, %106 : vector<16x1xi32>
    %c10_i32 = arith.constant 10 : i32
    %108 = vector.broadcast %c10_i32 : i32 to vector<16x1xi32>
    %109 = arith.cmpi eq, %5, %108 : vector<16x1xi32>
    %110 = arith.ori %107, %109 : vector<16x1xi1>
    %cst_26 = arith.constant 0.000000e+00 : f32
    %111 = vector.shape_cast %110 : vector<16x1xi1> to vector<16x1xi1>
    %112 = vector.broadcast %111 : vector<16x1xi1> to vector<16x128xi1>
    %113 = vector.shape_cast %105 : vector<1x128xf32> to vector<1x128xf32>
    %114 = vector.broadcast %113 : vector<1x128xf32> to vector<16x128xf32>
    %115 = vector.broadcast %cst_26 : f32 to vector<16x128xf32>
    %116 = arith.select %112, %114, %115 : vector<16x128xi1>, vector<16x128xf32>
    %117 = arith.addf %101, %116 : vector<16x128xf32>
    %c7_i32 = arith.constant 7 : i32
    %118 = tpu.dynamic_rotate %3 by %c7_i32 dim 0 : vector<16x128xf32>, i32 -> vector<16x128xf32>
    %119 = arith.mulf %118, %3 : vector<16x128xf32>
    %cst_27 = arith.constant dense<0.000000e+00> : vector<128xf32>
    %120 = vector.multi_reduction <add>, %119, %cst_27 [0] : vector<16x128xf32> to vector<128xf32>
    %121 = vector.shape_cast %120 : vector<128xf32> to vector<1x128xf32>
    %c7_i32_28 = arith.constant 7 : i32
    %122 = vector.broadcast %c7_i32_28 : i32 to vector<16x1xi32>
    %123 = arith.cmpi eq, %5, %122 : vector<16x1xi32>
    %c9_i32 = arith.constant 9 : i32
    %124 = vector.broadcast %c9_i32 : i32 to vector<16x1xi32>
    %125 = arith.cmpi eq, %5, %124 : vector<16x1xi32>
    %126 = arith.ori %123, %125 : vector<16x1xi1>
    %cst_29 = arith.constant 0.000000e+00 : f32
    %127 = vector.shape_cast %126 : vector<16x1xi1> to vector<16x1xi1>
    %128 = vector.broadcast %127 : vector<16x1xi1> to vector<16x128xi1>
    %129 = vector.shape_cast %121 : vector<1x128xf32> to vector<1x128xf32>
    %130 = vector.broadcast %129 : vector<1x128xf32> to vector<16x128xf32>
    %131 = vector.broadcast %cst_29 : f32 to vector<16x128xf32>
    %132 = arith.select %128, %130, %131 : vector<16x128xi1>, vector<16x128xf32>
    %133 = arith.addf %117, %132 : vector<16x128xf32>
    %c8_i32 = arith.constant 8 : i32
    %134 = tpu.dynamic_rotate %3 by %c8_i32 dim 0 : vector<16x128xf32>, i32 -> vector<16x128xf32>
    %135 = arith.mulf %134, %3 : vector<16x128xf32>
    %cst_30 = arith.constant dense<0.000000e+00> : vector<128xf32>
    %136 = vector.multi_reduction <add>, %135, %cst_30 [0] : vector<16x128xf32> to vector<128xf32>
    %137 = vector.shape_cast %136 : vector<128xf32> to vector<1x128xf32>
    %c8_i32_31 = arith.constant 8 : i32
    %138 = vector.broadcast %c8_i32_31 : i32 to vector<16x1xi32>
    %139 = arith.cmpi eq, %5, %138 : vector<16x1xi32>
    %c8_i32_32 = arith.constant 8 : i32
    %140 = vector.broadcast %c8_i32_32 : i32 to vector<16x1xi32>
    %141 = arith.cmpi eq, %5, %140 : vector<16x1xi32>
    %142 = arith.ori %139, %141 : vector<16x1xi1>
    %cst_33 = arith.constant 0.000000e+00 : f32
    %143 = vector.shape_cast %142 : vector<16x1xi1> to vector<16x1xi1>
    %144 = vector.broadcast %143 : vector<16x1xi1> to vector<16x128xi1>
    %145 = vector.shape_cast %137 : vector<1x128xf32> to vector<1x128xf32>
    %146 = vector.broadcast %145 : vector<1x128xf32> to vector<16x128xf32>
    %147 = vector.broadcast %cst_33 : f32 to vector<16x128xf32>
    %148 = arith.select %144, %146, %147 : vector<16x128xi1>, vector<16x128xf32>
    %149 = arith.addf %133, %148 : vector<16x128xf32>
    %cst_34 = arith.constant dense<0xFF800000> : vector<16xf32>
    %150 = vector.multi_reduction <maximumf>, %149, %cst_34 [1] : vector<16x128xf32> to vector<16xf32>
    %151 = vector.shape_cast %150 : vector<16xf32> to vector<16x1xf32>
    %152 = vector.broadcast %151 : vector<16x1xf32> to vector<16x128xf32>
    %153 = arith.subf %149, %152 : vector<16x128xf32>
    %154 = math.exp %153 : vector<16x128xf32>
    %c0_35 = arith.constant 0 : index
    %c0_36 = arith.constant 0 : index
    %155 = vector.load %arg6[%c0_35, %c0_36] : memref<128x128xf32, #tpu.memory_space<vmem>>, vector<128x128xf32>
    %cst_37 = arith.constant dense<0.000000e+00> : vector<16x128xf32>
    %156 = tpu.matmul %154, %155, %cst_37 {dimension_numbers = #tpu.dot_dimension_numbers<[1], [0], [0], [1], [0, 0, 1, 1], [], []>} : vector<16x128xf32>, vector<128x128xf32>, vector<16x128xf32> -> vector<16x128xf32>
    %157 = tpu.reciprocal %156 {approx = true} : vector<16x128xf32> -> vector<16x128xf32>
    %cst_38 = arith.constant 3.125000e-02 : f32
    %158 = vector.broadcast %cst_38 : f32 to vector<16x128xf32>
    %159 = arith.mulf %157, %158 : vector<16x128xf32>
    %160 = arith.mulf %3, %154 : vector<16x128xf32>
    %161 = arith.mulf %160, %159 : vector<16x128xf32>
    %c0_39 = arith.constant 0 : index
    %c0_40 = arith.constant 0 : index
    %162 = vector.load %arg7[%c0_39, %c0_40] : memref<8x256xf32, #tpu.memory_space<vmem>>, vector<8x256xf32>
    %163 = vector.extract_strided_slice %162 {offsets = [0, 0], sizes = [1, 128], strides = [1, 1]} : vector<8x256xf32> to vector<1x128xf32>
    %164 = vector.extract_strided_slice %162 {offsets = [1, 0], sizes = [1, 256], strides = [1, 1]} : vector<8x256xf32> to vector<1x256xf32>
    %165 = vector.extract_strided_slice %162 {offsets = [2, 0], sizes = [1, 128], strides = [1, 1]} : vector<8x256xf32> to vector<1x128xf32>
    %166 = vector.extract_strided_slice %162 {offsets = [3, 0], sizes = [1, 128], strides = [1, 1]} : vector<8x256xf32> to vector<1x128xf32>
    %167 = vector.extract_strided_slice %162 {offsets = [4, 0], sizes = [1, 128], strides = [1, 1]} : vector<8x256xf32> to vector<1x128xf32>
    %168 = vector.extract_strided_slice %162 {offsets = [5, 0], sizes = [1, 128], strides = [1, 1]} : vector<8x256xf32> to vector<1x128xf32>
    %169 = vector.extract_strided_slice %162 {offsets = [6, 0], sizes = [1, 128], strides = [1, 1]} : vector<8x256xf32> to vector<1x128xf32>
    %170 = arith.truncf %161 : vector<16x128xf32> to vector<16x128xbf16>
    %c0_41 = arith.constant 0 : index
    %c0_42 = arith.constant 0 : index
    %171 = vector.load %arg3[%c0_41, %c0_42] : memref<128x128xbf16, #tpu.memory_space<vmem>>, vector<128x128xbf16>
    %cst_43 = arith.constant dense<0.000000e+00> : vector<16x128xf32>
    %172 = tpu.matmul %170, %171, %cst_43 {dimension_numbers = #tpu.dot_dimension_numbers<[1], [0], [0], [1], [0, 0, 1, 1], [], []>} : vector<16x128xbf16>, vector<128x128xbf16>, vector<16x128xf32> -> vector<16x128xf32>
    %173 = vector.broadcast %163 : vector<1x128xf32> to vector<16x128xf32>
    %174 = arith.addf %172, %173 : vector<16x128xf32>
    %175 = arith.addf %3, %174 : vector<16x128xf32>
    %c0_44 = arith.constant 0 : index
    %c0_45 = arith.constant 0 : index
    %176 = vector.load %arg6[%c0_44, %c0_45] : memref<128x128xf32, #tpu.memory_space<vmem>>, vector<128x128xf32>
    %cst_46 = arith.constant dense<0.000000e+00> : vector<16x128xf32>
    %177 = tpu.matmul %175, %176, %cst_46 {dimension_numbers = #tpu.dot_dimension_numbers<[1], [0], [0], [1], [0, 0, 1, 1], [], []>} : vector<16x128xf32>, vector<128x128xf32>, vector<16x128xf32> -> vector<16x128xf32>
    %178 = arith.subf %175, %177 : vector<16x128xf32>
    %179 = arith.mulf %178, %178 : vector<16x128xf32>
    %c0_47 = arith.constant 0 : index
    %c0_48 = arith.constant 0 : index
    %180 = vector.load %arg6[%c0_47, %c0_48] : memref<128x128xf32, #tpu.memory_space<vmem>>, vector<128x128xf32>
    %cst_49 = arith.constant dense<0.000000e+00> : vector<16x128xf32>
    %181 = tpu.matmul %179, %180, %cst_49 {dimension_numbers = #tpu.dot_dimension_numbers<[1], [0], [0], [1], [0, 0, 1, 1], [], []>} : vector<16x128xf32>, vector<128x128xf32>, vector<16x128xf32> -> vector<16x128xf32>
    %cst_50 = arith.constant 9.99999974E-6 : f32
    %182 = vector.broadcast %cst_50 : f32 to vector<16x128xf32>
    %183 = arith.addf %181, %182 : vector<16x128xf32>
    %184 = math.rsqrt %183 : vector<16x128xf32>
    %185 = arith.mulf %178, %184 : vector<16x128xf32>
    %186 = vector.broadcast %166 : vector<1x128xf32> to vector<16x128xf32>
    %187 = arith.mulf %185, %186 : vector<16x128xf32>
    %188 = vector.broadcast %167 : vector<1x128xf32> to vector<16x128xf32>
    %189 = arith.addf %187, %188 : vector<16x128xf32>
    %190 = arith.truncf %189 : vector<16x128xf32> to vector<16x128xbf16>
    %c0_51 = arith.constant 0 : index
    %c0_52 = arith.constant 0 : index
    %191 = vector.load %arg4[%c0_51, %c0_52] : memref<128x256xbf16, #tpu.memory_space<vmem>>, vector<128x256xbf16>
    %cst_53 = arith.constant dense<0.000000e+00> : vector<16x256xf32>
    %192 = tpu.matmul %190, %191, %cst_53 {dimension_numbers = #tpu.dot_dimension_numbers<[1], [0], [0], [1], [0, 0, 1, 1], [], []>} : vector<16x128xbf16>, vector<128x256xbf16>, vector<16x256xf32> -> vector<16x256xf32>
    %193 = vector.broadcast %164 : vector<1x256xf32> to vector<16x256xf32>
    %194 = arith.addf %192, %193 : vector<16x256xf32>
    %cst_54 = arith.constant 0.000000e+00 : f32
    %195 = vector.broadcast %cst_54 : f32 to vector<16x256xf32>
    %196 = arith.maximumf %194, %195 : vector<16x256xf32>
    %197 = arith.truncf %196 : vector<16x256xf32> to vector<16x256xbf16>
    %c0_55 = arith.constant 0 : index
    %c0_56 = arith.constant 0 : index
    %198 = vector.load %arg5[%c0_55, %c0_56] : memref<256x128xbf16, #tpu.memory_space<vmem>>, vector<256x128xbf16>
    %cst_57 = arith.constant dense<0.000000e+00> : vector<16x128xf32>
    %199 = tpu.matmul %197, %198, %cst_57 {dimension_numbers = #tpu.dot_dimension_numbers<[1], [0], [0], [1], [0, 0, 1, 1], [], []>} : vector<16x256xbf16>, vector<256x128xbf16>, vector<16x128xf32> -> vector<16x128xf32>
    %200 = vector.broadcast %165 : vector<1x128xf32> to vector<16x128xf32>
    %201 = arith.addf %199, %200 : vector<16x128xf32>
    %202 = arith.addf %189, %201 : vector<16x128xf32>
    %c0_58 = arith.constant 0 : index
    %c0_59 = arith.constant 0 : index
    %203 = vector.load %arg6[%c0_58, %c0_59] : memref<128x128xf32, #tpu.memory_space<vmem>>, vector<128x128xf32>
    %cst_60 = arith.constant dense<0.000000e+00> : vector<16x128xf32>
    %204 = tpu.matmul %202, %203, %cst_60 {dimension_numbers = #tpu.dot_dimension_numbers<[1], [0], [0], [1], [0, 0, 1, 1], [], []>} : vector<16x128xf32>, vector<128x128xf32>, vector<16x128xf32> -> vector<16x128xf32>
    %205 = arith.subf %202, %204 : vector<16x128xf32>
    %206 = arith.mulf %205, %205 : vector<16x128xf32>
    %c0_61 = arith.constant 0 : index
    %c0_62 = arith.constant 0 : index
    %207 = vector.load %arg6[%c0_61, %c0_62] : memref<128x128xf32, #tpu.memory_space<vmem>>, vector<128x128xf32>
    %cst_63 = arith.constant dense<0.000000e+00> : vector<16x128xf32>
    %208 = tpu.matmul %206, %207, %cst_63 {dimension_numbers = #tpu.dot_dimension_numbers<[1], [0], [0], [1], [0, 0, 1, 1], [], []>} : vector<16x128xf32>, vector<128x128xf32>, vector<16x128xf32> -> vector<16x128xf32>
    %cst_64 = arith.constant 9.99999974E-6 : f32
    %209 = vector.broadcast %cst_64 : f32 to vector<16x128xf32>
    %210 = arith.addf %208, %209 : vector<16x128xf32>
    %211 = math.rsqrt %210 : vector<16x128xf32>
    %212 = arith.mulf %205, %211 : vector<16x128xf32>
    %213 = vector.broadcast %168 : vector<1x128xf32> to vector<16x128xf32>
    %214 = arith.mulf %212, %213 : vector<16x128xf32>
    %215 = vector.broadcast %169 : vector<1x128xf32> to vector<16x128xf32>
    %216 = arith.addf %214, %215 : vector<16x128xf32>
    %c0_65 = arith.constant 0 : index
    %c0_66 = arith.constant 0 : index
    %217 = vector.load %arg8[%c0_65, %c0_66] : memref<16x128xf32, #tpu.memory_space<vmem>>, vector<16x128xf32>
    tpu.vector_store %arg8[%c0_65, %c0_66], %216 {strides = array<i32>} : memref<16x128xf32, #tpu.memory_space<vmem>>, vector<16x128xf32>,
    return
  }
  func.func @transform_0(%arg0: i32) -> (i32, i32) {
    %c0_i32 = arith.constant 0 : i32
    %c0_i32_0 = arith.constant 0 : i32
    return %c0_i32, %arg0 : i32, i32
  }
  func.func @transform_1(%arg0: i32) -> (i32, i32) {
    %c0_i32 = arith.constant 0 : i32
    %c0_i32_0 = arith.constant 0 : i32
    %c0_i32_1 = arith.constant 0 : i32
    return %c0_i32, %c0_i32_0 : i32, i32
  }
  func.func @transform_2(%arg0: i32) -> (i32, i32) {
    %c0_i32 = arith.constant 0 : i32
    %c0_i32_0 = arith.constant 0 : i32
    %c0_i32_1 = arith.constant 0 : i32
    return %c0_i32, %c0_i32_0 : i32, i32
  }
  func.func @transform_3(%arg0: i32) -> (i32, i32) {
    %c0_i32 = arith.constant 0 : i32
    %c0_i32_0 = arith.constant 0 : i32
    %c0_i32_1 = arith.constant 0 : i32
    return %c0_i32, %c0_i32_0 : i32, i32
  }
  func.func @transform_4(%arg0: i32) -> (i32, i32) {
    %c0_i32 = arith.constant 0 : i32
    %c0_i32_0 = arith.constant 0 : i32
    %c0_i32_1 = arith.constant 0 : i32
    return %c0_i32, %c0_i32_0 : i32, i32
  }
  func.func @transform_5(%arg0: i32) -> (i32, i32) {
    %c0_i32 = arith.constant 0 : i32
    %c0_i32_0 = arith.constant 0 : i32
    %c0_i32_1 = arith.constant 0 : i32
    return %c0_i32, %c0_i32_0 : i32, i32
  }
  func.func @transform_6(%arg0: i32) -> (i32, i32) {
    %c0_i32 = arith.constant 0 : i32
    %c0_i32_0 = arith.constant 0 : i32
    %c0_i32_1 = arith.constant 0 : i32
    return %c0_i32, %c0_i32_0 : i32, i32
  }
  func.func @transform_7(%arg0: i32) -> (i32, i32) {
    %c0_i32 = arith.constant 0 : i32
    %c0_i32_0 = arith.constant 0 : i32
    return %c0_i32, %arg0 : i32, i32
  }
  func.func @transform_8(%arg0: i32) -> (i32, i32) {
    %c0_i32 = arith.constant 0 : i32
    %c0_i32_0 = arith.constant 0 : i32
    return %c0_i32, %arg0 : i32, i32
  }
}

</mosaic_0001>

<llo_original>
// kernel: tile.50
$region0: #{tile.50}
  #allocation0 [shape = 's32[1]{0}', space=sflag, size = 0x4, scoped, tag = 'scoped memory for tile.50']
  %s0 = inlined_call_operand.vmem [shape: f32[32], index: 0, kind: input, shape index: {}]
  %s1 = inlined_call_operand.vmem [shape: f32[4,32], index: 1, kind: output, shape index: {}]
  // Predicated region
  $region2: #{tile.50} parent=0 // pred_check
    _
  $region3: #{tile.50} parent=0 // pred_check_branch
    %3 = sbr.rel (0) target = $region5
  $region4: #{tile.50} parent=0 // pred_region
    _
  $region5: #{tile.50} parent=0 // pred_fallthru
    _
  %v4 = vld [vmem:[%s0] ss:$0 sm:$0xff]
  %5 = vst [vmem:[%s1] sm:$0xf] %v4

// kernel: tile.51
$region0: #{tile.51}
  %s0 = inlined_call_operand.vmem [shape: f32[4,32], index: 0, kind: input, shape index: {}]
  %s1 = inlined_call_operand.vmem [shape: f32[128], index: 1, kind: output, shape index: {}]
  $region1: #{tile.51} parent=0
    #allocation0 [shape = 'u8[4096]{0}', space=vmem, size = 0x1000, scoped, tag = 'scoped mem for output reshape']
    #allocation1 [shape = 'u8[4096]{0}', space=vmem, size = 0x1000, scoped, tag = 'scoped mem for input reshape']
    %s3 = sshll.u32 1, 4
    %s4 = ssub.s32 %s3, 1
    %v5 = vld [vmem:[%s0] sm:%s4]
    %6 = vst [vmem:[#allocation1] sm:%s4] %v5
    %v7 = vld [vmem:[#allocation1] sm:$0x1]
    %vm8 = vcmask 261120
    %9 = vst.msk [vmem:[#allocation0] sm:$0x1] %vm8, %v7
    %s10 = scalar_lea.vmem [#allocation1], 3
    %v11 = vld [vmem:[%s10] sm:$0x1]
    %12 = vrot.lane.b32.xlu0 %v11, 96
    %v13 = vpop.permute.xlu0 %12
    %vm14 = vcmask 1048320
    %15 = vst.msk [vmem:[#allocation0] sm:$0x1] %vm14, %v13
    %s16 = scalar_lea.vmem [#allocation1], 2
    %v17 = vld [vmem:[%s16] sm:$0x1]
    %18 = vrot.lane.b32.xlu0 %v17, 64
    %v19 = vpop.permute.xlu0 %18
    %vm20 = vcmask 785920
    %21 = vst.msk [vmem:[#allocation0] sm:$0x1] %vm20, %v19
    %s22 = scalar_lea.vmem [#allocation1], 1
    %v23 = vld [vmem:[%s22] sm:$0x1]
    %24 = vrot.lane.b32.xlu0 %v23, 32
    %v25 = vpop.permute.xlu0 %24
    %vm26 = vcmask 523520
    %27 = vst.msk [vmem:[#allocation0] sm:$0x1] %vm26, %v25
    %s29 = sshll.u32 1, 1
    %s30 = ssub.s32 %s29, 1
    %v32 = vld [vmem:[#allocation0] sm:%s30]
    %s33 = sshll.u32 1, 1
    %s34 = ssub.s32 %s33, 1
    %35 = vst [vmem:[%s1] sm:%s34] %v32

// kernel: tile.34
$region0: #{tile.34}
  #allocation0 [shape = 's32[1]{0}', space=sflag, size = 0x4, scoped, tag = 'scoped memory for tile.34']
  %s0 = inlined_call_operand.vmem [shape: f32[64], index: 0, kind: input, shape index: {}]
  %s1 = inlined_call_operand.vmem [shape: f32[4,64], index: 1, kind: output, shape index: {}]
  // Predicated region
  $region2: #{tile.34} parent=0 // pred_check
    _
  $region3: #{tile.34} parent=0 // pred_check_branch
    %3 = sbr.rel (0) target = $region5
  $region4: #{tile.34} parent=0 // pred_region
    _
  $region5: #{tile.34} parent=0 // pred_fallthru
    _
  %v4 = vld [vmem:[%s0] ss:$0 sm:$0xff]
  %5 = vst [vmem:[%s1] sm:$0xf] %v4

// kernel: encoder_layer_forward.1
$region0: #{encoder_layer_forward.1}
  #allocation0 [shape = 'u32[]', space=smem, size = 0x4, offset = 0x4, fixed_abs, tag = 'smem constant byte address 0x4 - core index']
  #allocation1 [shape = 'u32[144,128]{1,0:T(1,128)}', space=vmem, size = 0x12000, scoped, tag = 'internal scratch']
  %s0 = inlined_call_operand.vmem [shape: f32[16,256], index: 0, kind: input, shape index: {}]
  %s1 = inlined_call_operand.vmem [shape: f32[16,16], index: 1, kind: input, shape index: {}]
  %s2 = inlined_call_operand.vmem [shape: bf16[128,128], index: 2, kind: input, shape index: {}]
  %s3 = inlined_call_operand.vmem [shape: bf16[128,256], index: 3, kind: input, shape index: {}]
  %s4 = inlined_call_operand.vmem [shape: bf16[256,128], index: 4, kind: input, shape index: {}]
  %s5 = inlined_call_operand.vmem [shape: f32[128,128], index: 5, kind: input, shape index: {}]
  %s6 = inlined_call_operand.vmem [shape: f32[8,256], index: 6, kind: input, shape index: {}]
  %s7 = inlined_call_operand.vmem [shape: f32[16,256], index: 7, kind: output, shape index: {0}]
  %s8 = inlined_call_operand.vmem [shape: f32[16,256], index: 8, kind: output, shape index: {1}]
  %9 = xla_tuple %s7, %s8
  %s10 = sld [smem:[#allocation0]]
  $region175: #{encoder_layer_forward.1} parent=0
    _
  %s12 = ssub.s32 1, %s10
  %s13 = scalar_select 0, %s12, %s10
  $region1: #{encoder_layer_forward.1} parent=0
    #allocation2 [shape = 'u8[16384]{0}', space=vmem, size = 0x4000, scoped, tag = 'input window, operand 0']
    #allocation3 [shape = 'u8[16384]{0}', space=vmem, size = 0x4000, scoped, tag = 'output window, operand 0']
    #allocation4 [shape = 'u8[16384]{0}', space=vmem, size = 0x4000, scoped, tag = 'output window, operand 1']
    loop: start=0, step=1, limit=4
    $region2: #{encoder_layer_forward.1} parent=1 // loop_pre_header
      _
    $region3: #{encoder_layer_forward.1} parent=1 // loop_header
      %s15 = sphi 0, %s19
      %p16 = scmp.ge.s32.totalorder %s15, 4
      %s25 = sphi 0, %s27
      %s28 = sphi 0, %s25
      %s29 = sphi 0, %s28
      %s45 = sphi 0, %s29
      %s49 = sphi 0, %s49
      %s51 = sphi 0, %s49
      %s52 = sphi 0, %s51
      %s66 = sphi 0, %s52
      %s70 = sphi 0, %s70
      %s72 = sphi 0, %s70
      %s73 = sphi 0, %s72
      %s87 = sphi 0, %s73
      %s91 = sphi 0, %s91
      %s93 = sphi 0, %s91
      %s94 = sphi 0, %s93
      %s108 = sphi 0, %s94
      %s112 = sphi 0, %s112
      %s114 = sphi 0, %s112
      %s115 = sphi 0, %s114
      %s129 = sphi 0, %s115
      %s133 = sphi 0, %s133
      %s135 = sphi 0, %s133
      %s136 = sphi 0, %s135
      %s150 = sphi 0, %s136
      %s154 = sphi 0, %s154
      %s156 = sphi 0, %s154
      %s157 = sphi 0, %s156
      %s171 = sphi 0, %s157
      %s177 = sphi 0, %s179
      %s180 = sphi 0, %s177
      %s181 = sphi 0, %s180
      %s197 = sphi 0, %s181
      %s203 = sphi 0, %s205
      %s206 = sphi 0, %s203
      %s207 = sphi 0, %s206
      %s223 = sphi 0, %s207
    $region4: #{encoder_layer_forward.1} parent=1 // loop_header_branch
      %18 = sbr.rel (%p16) target = $region8
    $region5: #{encoder_layer_forward.1} parent=1 // loop_body
      %s20 = ssub.s32 %s15, 1
      %s21 = ssub.s32 %s15, 2
      %s22 = sadd.s32 %s15, 1
      %s23 = ssub.s32 %s15, %s22
      %p24 = scmp.eq.s32.totalorder %s23, 0
      %s26 = sadd.s32 %s25, 1
      %s27 = scalar_select %p24, %s25, %s26
      %p30 = pneg %p24
      %p31 = scmp.eq.s32.totalorder %s15, 1
      %p32 = por %p30, %p31
      %p33 = scmp.ne.s32.totalorder %s25, %s28
      %p34 = scmp.eq.s32.totalorder %s15, 0
      %p35 = por %p33, %p34
      %p36 = scmp.ne.s32.totalorder %s25, %s28
      %p37 = scmp.eq.s32.totalorder %s20, 1
      %p38 = por %p36, %p37
      %p39 = scmp.ne.s32.totalorder %s28, %s29
      %p40 = scmp.eq.s32.totalorder %s20, 0
      %p41 = por %p39, %p40
      %p42 = scmp.ne.s32.totalorder %s28, %s29
      %p43 = scmp.eq.s32.totalorder %s21, 1
      %p44 = por %p42, %p43
      %p46 = scmp.ne.s32.totalorder %s29, %s45
      %p47 = scmp.eq.s32.totalorder %s21, 0
      %p48 = por %p46, %p47
      %s50 = sadd.s32 %s49, 1
      %p53 = scmp.eq.s32.totalorder %s15, 1
      %p54 = scmp.ne.s32.totalorder %s49, %s51
      %p55 = scmp.eq.s32.totalorder %s15, 0
      %p56 = por %p54, %p55
      %p57 = scmp.ne.s32.totalorder %s49, %s51
      %p58 = scmp.eq.s32.totalorder %s20, 1
      %p59 = por %p57, %p58
      %p60 = scmp.ne.s32.totalorder %s51, %s52
      %p61 = scmp.eq.s32.totalorder %s20, 0
      %p62 = por %p60, %p61
      %p63 = scmp.ne.s32.totalorder %s51, %s52
      %p64 = scmp.eq.s32.totalorder %s21, 1
      %p65 = por %p63, %p64
      %p67 = scmp.ne.s32.totalorder %s52, %s66
      %p68 = scmp.eq.s32.totalorder %s21, 0
      %p69 = por %p67, %p68
      %s71 = sadd.s32 %s70, 1
      %p74 = scmp.eq.s32.totalorder %s15, 1
      %p75 = scmp.ne.s32.totalorder %s70, %s72
      %p76 = scmp.eq.s32.totalorder %s15, 0
      %p77 = por %p75, %p76
      %p78 = scmp.ne.s32.totalorder %s70, %s72
      %p79 = scmp.eq.s32.totalorder %s20, 1
      %p80 = por %p78, %p79
      %p81 = scmp.ne.s32.totalorder %s72, %s73
      %p82 = scmp.eq.s32.totalorder %s20, 0
      %p83 = por %p81, %p82
      %p84 = scmp.ne.s32.totalorder %s72, %s73
      %p85 = scmp.eq.s32.totalorder %s21, 1
      %p86 = por %p84, %p85
      %p88 = scmp.ne.s32.totalorder %s73, %s87
      %p89 = scmp.eq.s32.totalorder %s21, 0
      %p90 = por %p88, %p89
      %s92 = sadd.s32 %s91, 1
      %p95 = scmp.eq.s32.totalorder %s15, 1
      %p96 = scmp.ne.s32.totalorder %s91, %s93
      %p97 = scmp.eq.s32.totalorder %s15, 0
      %p98 = por %p96, %p97
      %p99 = scmp.ne.s32.totalorder %s91, %s93
      %p100 = scmp.eq.s32.totalorder %s20, 1
      %p101 = por %p99, %p100
      %p102 = scmp.ne.s32.totalorder %s93, %s94
      %p103 = scmp.eq.s32.totalorder %s20, 0
      %p104 = por %p102, %p103
      %p105 = scmp.ne.s32.totalorder %s93, %s94
      %p106 = scmp.eq.s32.totalorder %s21, 1
      %p107 = por %p105, %p106
      %p109 = scmp.ne.s32.totalorder %s94, %s108
      %p110 = scmp.eq.s32.totalorder %s21, 0
      %p111 = por %p109, %p110
      %s113 = sadd.s32 %s112, 1
      %p116 = scmp.eq.s32.totalorder %s15, 1
      %p117 = scmp.ne.s32.totalorder %s112, %s114
      %p118 = scmp.eq.s32.totalorder %s15, 0
      %p119 = por %p117, %p118
      %p120 = scmp.ne.s32.totalorder %s112, %s114
      %p121 = scmp.eq.s32.totalorder %s20, 1
      %p122 = por %p120, %p121
      %p123 = scmp.ne.s32.totalorder %s114, %s115
      %p124 = scmp.eq.s32.totalorder %s20, 0
      %p125 = por %p123, %p124
      %p126 = scmp.ne.s32.totalorder %s114, %s115
      %p127 = scmp.eq.s32.totalorder %s21, 1
      %p128 = por %p126, %p127
      %p130 = scmp.ne.s32.totalorder %s115, %s129
      %p131 = scmp.eq.s32.totalorder %s21, 0
      %p132 = por %p130, %p131
      %s134 = sadd.s32 %s133, 1
      %p137 = scmp.eq.s32.totalorder %s15, 1
      %p138 = scmp.ne.s32.totalorder %s133, %s135
      %p139 = scmp.eq.s32.totalorder %s15, 0
      %p140 = por %p138, %p139
      %p141 = scmp.ne.s32.totalorder %s133, %s135
      %p142 = scmp.eq.s32.totalorder %s20, 1
      %p143 = por %p141, %p142
      %p144 = scmp.ne.s32.totalorder %s135, %s136
      %p145 = scmp.eq.s32.totalorder %s20, 0
      %p146 = por %p144, %p145
      %p147 = scmp.ne.s32.totalorder %s135, %s136
      %p148 = scmp.eq.s32.totalorder %s21, 1
      %p149 = por %p147, %p148
      %p151 = scmp.ne.s32.totalorder %s136, %s150
      %p152 = scmp.eq.s32.totalorder %s21, 0
      %p153 = por %p151, %p152
      %s155 = sadd.s32 %s154, 1
      %p158 = scmp.eq.s32.totalorder %s15, 1
      %p159 = scmp.ne.s32.totalorder %s154, %s156
      %p160 = scmp.eq.s32.totalorder %s15, 0
      %p161 = por %p159, %p160
      %p162 = scmp.ne.s32.totalorder %s154, %s156
      %p163 = scmp.eq.s32.totalorder %s20, 1
      %p164 = por %p162, %p163
      %p165 = scmp.ne.s32.totalorder %s156, %s157
      %p166 = scmp.eq.s32.totalorder %s20, 0
      %p167 = por %p165, %p166
      %p168 = scmp.ne.s32.totalorder %s156, %s157
      %p169 = scmp.eq.s32.totalorder %s21, 1
      %p170 = por %p168, %p169
      %p172 = scmp.ne.s32.totalorder %s157, %s171
      %p173 = scmp.eq.s32.totalorder %s21, 0
      %p174 = por %p172, %p173
      %s175 = ssub.s32 %s15, %s22
      %p176 = scmp.eq.s32.totalorder %s175, 0
      %s178 = sadd.s32 %s177, 1
      %s179 = scalar_select %p176, %s177, %s178
      %p182 = pneg %p176
      %p183 = scmp.eq.s32.totalorder %s15, 1
      %p184 = por %p182, %p183
      %p185 = scmp.ne.s32.totalorder %s177, %s180
      %p186 = scmp.eq.s32.totalorder %s15, 0
      %p187 = por %p185, %p186
      %p188 = scmp.ne.s32.totalorder %s177, %s180
      %p189 = scmp.eq.s32.totalorder %s20, 1
      %p190 = por %p188, %p189
      %p191 = scmp.ne.s32.totalorder %s180, %s181
      %p192 = scmp.eq.s32.totalorder %s20, 0
      %p193 = por %p191, %p192
      %p194 = scmp.ne.s32.totalorder %s180, %s181
      %p195 = scmp.eq.s32.totalorder %s21, 1
      %p196 = por %p194, %p195
      %p198 = scmp.ne.s32.totalorder %s181, %s197
      %p199 = scmp.eq.s32.totalorder %s21, 0
      %p200 = por %p198, %p199
      %s201 = ssub.s32 %s15, %s22
      %p202 = scmp.eq.s32.totalorder %s201, 0
      %s204 = sadd.s32 %s203, 1
      %s205 = scalar_select %p202, %s203, %s204
      %p208 = pneg %p202
      %p209 = scmp.eq.s32.totalorder %s15, 1
      %p210 = por %p208, %p209
      %p211 = scmp.ne.s32.totalorder %s203, %s206
      %p212 = scmp.eq.s32.totalorder %s15, 0
      %p213 = por %p211, %p212
      %p214 = scmp.ne.s32.totalorder %s203, %s206
      %p215 = scmp.eq.s32.totalorder %s20, 1
      %p216 = por %p214, %p215
      %p217 = scmp.ne.s32.totalorder %s206, %s207
      %p218 = scmp.eq.s32.totalorder %s20, 0
      %p219 = por %p217, %p218
      %p220 = scmp.ne.s32.totalorder %s206, %s207
      %p221 = scmp.eq.s32.totalorder %s21, 1
      %p222 = por %p220, %p221
      %p224 = scmp.ne.s32.totalorder %s207, %s223
      %p225 = scmp.eq.s32.totalorder %s21, 0
      %p226 = por %p224, %p225
      %p227 = scmp.le.s32.totalorder 1, %s15
      %p228 = scmp.lt.s32.totalorder %s15, 3
      %p229 = pnand %p227, %p228
      %p230 = pneg %p229
      // Predicated region
      $region9: #{encoder_layer_forward.1} parent=5 // pred_check
        _
      $region10: #{encoder_layer_forward.1} parent=5 // pred_check_branch
        %232 = sbr.rel (%p229) target = $region12
      $region11: #{encoder_layer_forward.1} parent=5 // pred_region
        %s233 = ssub.s32 %s15, 1
        // Predicated region
        $region13: #{encoder_layer_forward.1} parent=11 // pred_check
          %p234 = pneg %p62
        $region14: #{encoder_layer_forward.1} parent=11 // pred_check_branch
          %236 = sbr.rel (%p234) target = $region16
        $region15: #{encoder_layer_forward.1} parent=11 // pred_region
          _
        $region16: #{encoder_layer_forward.1} parent=11 // pred_fallthru
          _
        // Predicated region
        $region17: #{encoder_layer_forward.1} parent=11 // pred_check
          %p237 = pneg %p83
        $region18: #{encoder_layer_forward.1} parent=11 // pred_check_branch
          %239 = sbr.rel (%p237) target = $region20
        $region19: #{encoder_layer_forward.1} parent=11 // pred_region
          _
        $region20: #{encoder_layer_forward.1} parent=11 // pred_fallthru
          _
        // Predicated region
        $region21: #{encoder_layer_forward.1} parent=11 // pred_check
          %p240 = pneg %p104
        $region22: #{encoder_layer_forward.1} parent=11 // pred_check_branch
          %242 = sbr.rel (%p240) target = $region24
        $region23: #{encoder_layer_forward.1} parent=11 // pred_region
          _
        $region24: #{encoder_layer_forward.1} parent=11 // pred_fallthru
          _
        // Predicated region
        $region25: #{encoder_layer_forward.1} parent=11 // pred_check
          %p243 = pneg %p125
        $region26: #{encoder_layer_forward.1} parent=11 // pred_check_branch
          %245 = sbr.rel (%p243) target = $region28
        $region27: #{encoder_layer_forward.1} parent=11 // pred_region
          _
        $region28: #{encoder_layer_forward.1} parent=11 // pred_fallthru
          _
        // Predicated region
        $region29: #{encoder_layer_forward.1} parent=11 // pred_check
          %p246 = pneg %p146
        $region30: #{encoder_layer_forward.1} parent=11 // pred_check_branch
          %248 = sbr.rel (%p246) target = $region32
        $region31: #{encoder_layer_forward.1} parent=11 // pred_region
          _
        $region32: #{encoder_layer_forward.1} parent=11 // pred_fallthru
          _
        // Predicated region
        $region33: #{encoder_layer_forward.1} parent=11 // pred_check
          %p249 = pneg %p167
        $region34: #{encoder_layer_forward.1} parent=11 // pred_check_branch
          %251 = sbr.rel (%p249) target = $region36
        $region35: #{encoder_layer_forward.1} parent=11 // pred_region
          _
        $region36: #{encoder_layer_forward.1} parent=11 // pred_fallthru
          _
      $region12: #{encoder_layer_forward.1} parent=5 // pred_fallthru
        _
      %p252 = scmp.lt.s32.totalorder %s15, 2
      // Predicated region
      $region37: #{encoder_layer_forward.1} parent=5 // pred_check
        %p253 = pneg %p252
      $region38: #{encoder_layer_forward.1} parent=5 // pred_check_branch
        %255 = sbr.rel (%p253) target = $region40
      $region39: #{encoder_layer_forward.1} parent=5 // pred_region
        // Predicated region
        $region41: #{encoder_layer_forward.1} parent=39 // pred_check
          %p256 = pneg %p35
        $region42: #{encoder_layer_forward.1} parent=39 // pred_check_branch
          %258 = sbr.rel (%p256) target = $region44
        $region43: #{encoder_layer_forward.1} parent=39 // pred_region
          %s259 = sand.u32 %s25, 1
          %s260 = sand.u32 %s25, 1
          %s261 = smul.addr %s260, 16
          %s262 = scalar_lea.vmem [#allocation2], %s261
          %s263 = smul.addr %s15, 8
          %s264 = scalar_lea.vmem %s0, %s263
          // Predicated region
          $region45: #{encoder_layer_forward.1} parent=43 // pred_check
            _
          $region46: #{encoder_layer_forward.1} parent=43 // pred_check_branch
            %266 = sbr.rel (0) target = $region48
          $region47: #{encoder_layer_forward.1} parent=43 // pred_region
            // Predicated region
            $region49: #{encoder_layer_forward.1} parent=47 // pred_check
              _
            $region50: #{encoder_layer_forward.1} parent=47 // pred_check_branch
              %268 = sbr.rel (0) target = $region52
            $region51: #{encoder_layer_forward.1} parent=47 // pred_region
              // Predicated region
              $region64: #{encoder_layer_forward.1} parent=51 // pred_check
                _
              $region65: #{encoder_layer_forward.1} parent=51 // pred_check_branch
                %286 = sbr.rel (0) target = $region67
              $region66: #{encoder_layer_forward.1} parent=51 // pred_region
                loop: start=0, step=1, limit=1
                $region68: #{encoder_layer_forward.1} parent=66 // loop_pre_header
                  _
                $region69: #{encoder_layer_forward.1} parent=66 // loop_header
                  %s288 = sphi 0, %s292
                  %p289 = scmp.ge.s32.totalorder %s288, 1
                  %s293 = sphi %s264, %s264
                  %s294 = sphi %s262, %s262
                $region70: #{encoder_layer_forward.1} parent=66 // loop_header_branch
                  %291 = sbr.rel (%p289) target = $region74
                $region71: #{encoder_layer_forward.1} parent=66 // loop_body
                  %v295 = vld [vmem:[%s293] sm:$0xff]
                  %296 = vst [vmem:[%s294] sm:$0xff] %v295
                  %v297 = vld [vmem:[%s293 + $0x10] sm:$0xff]
                  %298 = vst [vmem:[%s294 + $0x8] sm:$0xff] %v297
                $region72: #{encoder_layer_forward.1} parent=66 // loop_footer
                  %s292 = sadd.s32 1, %s288
                $region73: #{encoder_layer_forward.1} parent=66 // loop_footer_branch
                  %287 = sbr.rel target = $region69
                $region74: #{encoder_layer_forward.1} parent=66 // loop_exit
                  _
              $region67: #{encoder_layer_forward.1} parent=51 // pred_fallthru
                _
              // Predicated region
              $region75: #{encoder_layer_forward.1} parent=51 // pred_check
                _
              $region76: #{encoder_layer_forward.1} parent=51 // pred_check_branch
                %300 = sbr.rel target = $region78
              $region77: #{encoder_layer_forward.1} parent=51 // pred_region
                _
              $region78: #{encoder_layer_forward.1} parent=51 // pred_fallthru
                _
            $region52: #{encoder_layer_forward.1} parent=47 // pred_fallthru
              _
            // Predicated region
            $region53: #{encoder_layer_forward.1} parent=47 // pred_check
              _
            $region54: #{encoder_layer_forward.1} parent=47 // pred_check_branch
              %270 = sbr.rel target = $region56
            $region55: #{encoder_layer_forward.1} parent=47 // pred_region
              %s272 = ssub.s32 256, 1
              loop: start=0, step=1, limit=1
              $region57: #{encoder_layer_forward.1} parent=55 // loop_pre_header
                _
              $region58: #{encoder_layer_forward.1} parent=55 // loop_header
                %s274 = sphi 0, %s278
                %p275 = scmp.ge.s32.totalorder %s274, 1
                %s279 = sphi %s264, %s264
                %s280 = sphi %s262, %s262
              $region59: #{encoder_layer_forward.1} parent=55 // loop_header_branch
                %277 = sbr.rel (%p275) target = $region63
              $region60: #{encoder_layer_forward.1} parent=55 // loop_body
                %v281 = vld [vmem:[%s279] sm:%s272]
                %282 = vst [vmem:[%s280] sm:%s272] %v281
                %v283 = vld [vmem:[%s279 + $0x10] sm:%s272]
                %284 = vst [vmem:[%s280 + $0x8] sm:%s272] %v283
              $region61: #{encoder_layer_forward.1} parent=55 // loop_footer
                %s278 = sadd.s32 1, %s274
              $region62: #{encoder_layer_forward.1} parent=55 // loop_footer_branch
                %273 = sbr.rel target = $region58
              $region63: #{encoder_layer_forward.1} parent=55 // loop_exit
                _
            $region56: #{encoder_layer_forward.1} parent=47 // pred_fallthru
              _
          $region48: #{encoder_layer_forward.1} parent=43 // pred_fallthru
            _
          %301 = vnop
        $region44: #{encoder_layer_forward.1} parent=39 // pred_fallthru
          _
      $region40: #{encoder_layer_forward.1} parent=5 // pred_fallthru
        _
      %p302 = scmp.le.s32.totalorder 1, %s15
      %p303 = scmp.lt.s32.totalorder %s15, 3
      %p304 = pnand %p302, %p303
      %p305 = pneg %p304
      // Predicated region
      $region79: #{encoder_layer_forward.1} parent=5 // pred_check
        _
      $region80: #{encoder_layer_forward.1} parent=5 // pred_check_branch
        %307 = sbr.rel (%p304) target = $region82
      $region81: #{encoder_layer_forward.1} parent=5 // pred_region
        %s308 = ssub.s32 %s15, 1
        %s309 = sand.u32 %s28, 1
        %s310 = sand.u32 %s28, 1
        %s311 = smul.addr %s310, 16
        %s312 = scalar_lea.vmem [#allocation2], %s311
        // Predicated region
        $region83: #{encoder_layer_forward.1} parent=81 // pred_check
          %p313 = pneg %p41
        $region84: #{encoder_layer_forward.1} parent=81 // pred_check_branch
          %315 = sbr.rel (%p313) target = $region86
        $region85: #{encoder_layer_forward.1} parent=81 // pred_region
          _
        $region86: #{encoder_layer_forward.1} parent=81 // pred_fallthru
          _
        %s316 = sand.u32 %s28, 1
        %s317 = sand.u32 %s28, 1
        %s318 = smul.addr %s317, 16
        %s319 = scalar_lea.vmem [#allocation2], %s318
        %p320 = pneg %p41
        %p321 = pneg %p38
        %p322 = pneg %p62
        %p323 = pneg %p59
        %p324 = pneg %p83
        %p325 = pneg %p80
        %p326 = pneg %p104
        %p327 = pneg %p101
        %p328 = pneg %p125
        %p329 = pneg %p122
        %p330 = pneg %p146
        %p331 = pneg %p143
        %p332 = pneg %p167
        %p333 = pneg %p164
        %p334 = pneg %p193
        %p335 = pneg %p190
        %s336 = sand.u32 %s180, 1
        %s337 = sand.u32 %s180, 1
        %s338 = smul.addr %s337, 16
        %s339 = scalar_lea.vmem [#allocation3], %s338
        %p340 = pneg %p219
        %p341 = pneg %p216
        %s342 = sand.u32 %s206, 1
        %s343 = sand.u32 %s206, 1
        %s344 = smul.addr %s343, 16
        %s345 = scalar_lea.vmem [#allocation4], %s344
        %v347 = vld [vmem:[%s312] sm:$0xff]
        %v348 = vld [vmem:[%s312 + $0x8] sm:$0xff]
        %v349 = vld [vmem:[%s1] sm:$0xff]
        %v350 = vld [vmem:[%s1 + $0x8] sm:$0xff]
        %vm351 = vcmask 130048
        %v353 = vsel %vm351, %v349, 0
        %v356 = vsel %vm351, %v350, 0
        %358 = vmatprep.subr.mxu0 0.0
        %359 = vmatpush1.msra.mxu0 0.0
        %360 = vmatprep.subr.mxu0 0.0
        %361 = vmatpush1.msra.mxu0 0.0
        %362 = vmatprep.subr.mxu0 0.0
        %363 = vmatpush1.msra.mxu0 0.0
        %364 = vmatprep.subr.mxu0 0.0
        %365 = vmatpush1.msra.mxu0 0.0
        %366 = vmatprep.subr.mxu0 0.0
        %367 = vmatpush1.msra.mxu0 0.0
        %368 = vmatprep.subr.mxu0 0.0
        %369 = vmatpush1.msra.mxu0 0.0
        %370 = vmatprep.subr.mxu0 0.0
        %371 = vmatpush1.msra.mxu0 0.0
        %372 = vmatprep.subr.mxu0 0.0
        %373 = vmatpush1.msra.mxu0 0.0
        %374 = vmatprep.subr.mxu0 0.0
        %375 = vmatpush1.msra.mxu0 0.0
        %376 = vmatprep.subr.mxu0 0.0
        %377 = vmatpush1.msra.mxu0 0.0
        %378 = vmatprep.subr.mxu0 0.0
        %379 = vmatpush1.msra.mxu0 0.0
        %380 = vmatprep.subr.mxu0 0.0
        %381 = vmatpush1.msra.mxu0 0.0
        %382 = vmatprep.subr.mxu0 0.0
        %383 = vmatpush1.msra.mxu0 0.0
        %384 = vmatprep.subr.mxu0 0.0
        %385 = vmatpush1.msra.mxu0 0.0
        %386 = vmatprep.subr.mxu0 0.0
        %387 = vmatpush1.msra.mxu0 %v348
        %388 = vmatprep.subr.mxu0 0.0
        %389 = vmatpush1.msra.mxu0 %v347
        %390 = vmatprep.subr.mxu0 0.0
        %391 = vmatpush2.msra.mxu0 0.0
        %392 = vmatprep.subr.mxu0 0.0
        %393 = vmatpush2.msra.mxu0 0.0
        %394 = vmatprep.subr.mxu0 0.0
        %395 = vmatpush2.msra.mxu0 0.0
        %396 = vmatprep.subr.mxu0 0.0
        %397 = vmatpush2.msra.mxu0 0.0
        %398 = vmatprep.subr.mxu0 0.0
        %399 = vmatpush2.msra.mxu0 0.0
        %400 = vmatprep.subr.mxu0 0.0
        %401 = vmatpush2.msra.mxu0 0.0
        %402 = vmatprep.subr.mxu0 0.0
        %403 = vmatpush2.msra.mxu0 0.0
        %404 = vmatprep.subr.mxu0 0.0
        %405 = vmatpush2.msra.mxu0 0.0
        %406 = vmatprep.subr.mxu0 0.0
        %407 = vmatpush2.msra.mxu0 0.0
        %408 = vmatprep.subr.mxu0 0.0
        %409 = vmatpush2.msra.mxu0 0.0
        %410 = vmatprep.subr.mxu0 0.0
        %411 = vmatpush2.msra.mxu0 0.0
        %412 = vmatprep.subr.mxu0 0.0
        %413 = vmatpush2.msra.mxu0 0.0
        %414 = vmatprep.subr.mxu0 0.0
        %415 = vmatpush2.msra.mxu0 0.0
        %416 = vmatprep.subr.mxu0 0.0
        %417 = vmatpush2.msra.mxu0 0.0
        %418 = vmatprep.subr.mxu0 0.0
        %419 = vmatpush2.msra.mxu0 0.0
        %420 = vmatprep.subr.mxu0 0.0
        %421 = vmatpush2.msra.mxu0 0.0
        %422 = vmatprep.mubr.f32.mxu0 0.0
        %423 = vmatmul.mubr.f32.gmra.mxu0 %v353
        %v424 = vpop.f32.mrf.mxu0
        %v425 = vadd.f32 0.0, %v424
        %v426 = vpop.f32.mrf.mxu0
        %427 = vmatprep.mubr.f32.mxu0 0.0
        %428 = vmatmul.mubr.f32.gmra.mxu0 %v356
        %v429 = vpop.f32.mrf.mxu0
        %v430 = vadd.f32 0.0, %v429
        %v431 = vpop.f32.mrf.mxu0
        %432 = vdwg.mxu0
        %v433 = vsub.f32 %v347, %v425
        %v434 = vsub.f32 %v348, %v430
        %435 = vst [vmem:[%s345] sm:$0xff] %v425
        %436 = vst [vmem:[%s345 + $0x8] sm:$0xff] %v430
        %v437 = vlaneseq
        %v438 = vshrl.u32 %v437, 7
        %v439 = vadd.s32 %v438, 8
        %v440 = vmul.f32 %v433, %v433
        %v441 = vmul.f32 %v434, %v434
        %v442 = vadd.f32 %v440, %v441
        %v443 = vrot.slane %v442, 4
        %v444 = vadd.f32 %v442, %v443
        %v445 = vrot.slane %v444, 2
        %v446 = vadd.f32 %v444, %v445
        %v447 = vrot.slane %v446, 1
        %v448 = vadd.f32 %v446, %v447
        %vm449 = vcmp.eq.s32.totalorder %v438, 0
        %vm450 = vcmp.eq.s32.totalorder %v439, 0
        %v451 = vsel %vm449, 1, 0
        %v452 = vsel %vm450, 1, 0
        %vm453 = vcmp.eq.s32.totalorder %v451, 1
        %vm454 = vcmp.eq.s32.totalorder %v452, 1
        %v455 = vsel %vm453, %v448, 0.0
        %v456 = vsel %vm454, %v448, 0.0
        %v457 = vadd.f32 %v455, 0.0
        %v458 = vadd.f32 %v456, 0.0
        %v459 = vrot.slane %v433, 7
        %v460 = vrot.slane %v434, 7
        %vm461 = vcmp.lt.s32.totalorder %v438, 1
        %v462 = vsel %vm461, %v459, %v460
        %v463 = vsel %vm461, %v460, %v459
        %v464 = vmul.f32 %v463, %v433
        %v465 = vmul.f32 %v462, %v434
        %v466 = vadd.f32 %v464, %v465
        %v467 = vrot.slane %v466, 4
        %v468 = vadd.f32 %v466, %v467
        %v469 = vrot.slane %v468, 2
        %v470 = vadd.f32 %v468, %v469
        %v471 = vrot.slane %v470, 1
        %v472 = vadd.f32 %v470, %v471
        %vm473 = vcmp.eq.s32.totalorder %v438, 1
        %vm474 = vcmp.eq.s32.totalorder %v439, 1
        %vm475 = vcmp.eq.s32.totalorder %v438, 15
        %vm476 = vcmp.eq.s32.totalorder %v439, 15
        %vm477 = vmor %vm473, %vm475
        %vm478 = vmor %vm474, %vm476
        %v479 = vsel %vm477, 1, 0
        %v480 = vsel %vm478, 1, 0
        %vm481 = vcmp.eq.s32.totalorder %v479, 1
        %vm482 = vcmp.eq.s32.totalorder %v480, 1
        %v483 = vsel %vm481, %v472, 0.0
        %v484 = vsel %vm482, %v472, 0.0
        %v485 = vadd.f32 %v457, %v483
        %v486 = vadd.f32 %v458, %v484
        %v487 = vrot.slane %v433, 6
        %v488 = vrot.slane %v434, 6
        %vm489 = vcmp.lt.s32.totalorder %v438, 2
        %v490 = vsel %vm489, %v487, %v488
        %v491 = vsel %vm489, %v488, %v487
        %v492 = vmul.f32 %v491, %v433
        %v493 = vmul.f32 %v490, %v434
        %v494 = vadd.f32 %v492, %v493
        %v495 = vrot.slane %v494, 4
        %v496 = vadd.f32 %v494, %v495
        %v497 = vrot.slane %v496, 2
        %v498 = vadd.f32 %v496, %v497
        %v499 = vrot.slane %v498, 1
        %v500 = vadd.f32 %v498, %v499
        %vm501 = vcmp.eq.s32.totalorder %v438, 2
        %vm502 = vcmp.eq.s32.totalorder %v439, 2
        %vm503 = vcmp.eq.s32.totalorder %v438, 14
        %vm504 = vcmp.eq.s32.totalorder %v439, 14
        %vm505 = vmor %vm501, %vm503
        %vm506 = vmor %vm502, %vm504
        %v507 = vsel %vm505, 1, 0
        %v508 = vsel %vm506, 1, 0
        %vm509 = vcmp.eq.s32.totalorder %v507, 1
        %vm510 = vcmp.eq.s32.totalorder %v508, 1
        %v511 = vsel %vm509, %v500, 0.0
        %v512 = vsel %vm510, %v500, 0.0
        %v513 = vadd.f32 %v485, %v511
        %v514 = vadd.f32 %v486, %v512
        %v515 = vrot.slane %v433, 5
        %v516 = vrot.slane %v434, 5
        %vm517 = vcmp.lt.s32.totalorder %v438, 3
        %v518 = vsel %vm517, %v515, %v516
        %v519 = vsel %vm517, %v516, %v515
        %v520 = vmul.f32 %v519, %v433
        %v521 = vmul.f32 %v518, %v434
        %v522 = vadd.f32 %v520, %v521
        %v523 = vrot.slane %v522, 4
        %v524 = vadd.f32 %v522, %v523
        %v525 = vrot.slane %v524, 2
        %v526 = vadd.f32 %v524, %v525
        %v527 = vrot.slane %v526, 1
        %v528 = vadd.f32 %v526, %v527
        %vm529 = vcmp.eq.s32.totalorder %v438, 3
        %vm530 = vcmp.eq.s32.totalorder %v439, 3
        %vm531 = vcmp.eq.s32.totalorder %v438, 13
        %vm532 = vcmp.eq.s32.totalorder %v439, 13
        %vm533 = vmor %vm529, %vm531
        %vm534 = vmor %vm530, %vm532
        %v535 = vsel %vm533, 1, 0
        %v536 = vsel %vm534, 1, 0
        %vm537 = vcmp.eq.s32.totalorder %v535, 1
        %vm538 = vcmp.eq.s32.totalorder %v536, 1
        %v539 = vsel %vm537, %v528, 0.0
        %v540 = vsel %vm538, %v528, 0.0
        %v541 = vadd.f32 %v513, %v539
        %v542 = vadd.f32 %v514, %v540
        %v543 = vrot.slane %v433, 4
        %v544 = vrot.slane %v434, 4
        %vm545 = vcmp.lt.s32.totalorder %v438, 4
        %v546 = vsel %vm545, %v543, %v544
        %v547 = vsel %vm545, %v544, %v543
        %v548 = vmul.f32 %v547, %v433
        %v549 = vmul.f32 %v546, %v434
        %v550 = vadd.f32 %v548, %v549
        %v551 = vrot.slane %v550, 4
        %v552 = vadd.f32 %v550, %v551
        %v553 = vrot.slane %v552, 2
        %v554 = vadd.f32 %v552, %v553
        %v555 = vrot.slane %v554, 1
        %v556 = vadd.f32 %v554, %v555
        %vm557 = vcmp.eq.s32.totalorder %v438, 4
        %vm558 = vcmp.eq.s32.totalorder %v439, 4
        %vm559 = vcmp.eq.s32.totalorder %v438, 12
        %vm560 = vcmp.eq.s32.totalorder %v439, 12
        %vm561 = vmor %vm557, %vm559
        %vm562 = vmor %vm558, %vm560
        %v563 = vsel %vm561, 1, 0
        %v564 = vsel %vm562, 1, 0
        %vm565 = vcmp.eq.s32.totalorder %v563, 1
        %vm566 = vcmp.eq.s32.totalorder %v564, 1
        %v567 = vsel %vm565, %v556, 0.0
        %v568 = vsel %vm566, %v556, 0.0
        %v569 = vadd.f32 %v541, %v567
        %v570 = vadd.f32 %v542, %v568
        %v571 = vrot.slane %v433, 3
        %v572 = vrot.slane %v434, 3
        %vm573 = vcmp.lt.s32.totalorder %v438, 5
        %v574 = vsel %vm573, %v571, %v572
        %v575 = vsel %vm573, %v572, %v571
        %v576 = vmul.f32 %v575, %v433
        %v577 = vmul.f32 %v574, %v434
        %v578 = vadd.f32 %v576, %v577
        %v579 = vrot.slane %v578, 4
        %v580 = vadd.f32 %v578, %v579
        %v581 = vrot.slane %v580, 2
        %v582 = vadd.f32 %v580, %v581
        %v583 = vrot.slane %v582, 1
        %v584 = vadd.f32 %v582, %v583
        %vm585 = vcmp.eq.s32.totalorder %v438, 5
        %vm586 = vcmp.eq.s32.totalorder %v439, 5
        %vm587 = vcmp.eq.s32.totalorder %v438, 11
        %vm588 = vcmp.eq.s32.totalorder %v439, 11
        %vm589 = vmor %vm585, %vm587
        %vm590 = vmor %vm586, %vm588
        %v591 = vsel %vm589, 1, 0
        %v592 = vsel %vm590, 1, 0
        %vm593 = vcmp.eq.s32.totalorder %v591, 1
        %vm594 = vcmp.eq.s32.totalorder %v592, 1
        %v595 = vsel %vm593, %v584, 0.0
        %v596 = vsel %vm594, %v584, 0.0
        %v597 = vadd.f32 %v569, %v595
        %v598 = vadd.f32 %v570, %v596
        %v599 = vrot.slane %v433, 2
        %v600 = vrot.slane %v434, 2
        %vm601 = vcmp.lt.s32.totalorder %v438, 6
        %v602 = vsel %vm601, %v599, %v600
        %v603 = vsel %vm601, %v600, %v599
        %v604 = vmul.f32 %v603, %v433
        %v605 = vmul.f32 %v602, %v434
        %v606 = vadd.f32 %v604, %v605
        %v607 = vrot.slane %v606, 4
        %v608 = vadd.f32 %v606, %v607
        %v609 = vrot.slane %v608, 2
        %v610 = vadd.f32 %v608, %v609
        %v611 = vrot.slane %v610, 1
        %v612 = vadd.f32 %v610, %v611
        %vm613 = vcmp.eq.s32.totalorder %v438, 6
        %vm614 = vcmp.eq.s32.totalorder %v439, 6
        %vm615 = vcmp.eq.s32.totalorder %v438, 10
        %vm616 = vcmp.eq.s32.totalorder %v439, 10
        %vm617 = vmor %vm613, %vm615
        %vm618 = vmor %vm614, %vm616
        %v619 = vsel %vm617, 1, 0
        %v620 = vsel %vm618, 1, 0
        %vm621 = vcmp.eq.s32.totalorder %v619, 1
        %vm622 = vcmp.eq.s32.totalorder %v620, 1
        %v623 = vsel %vm621, %v612, 0.0
        %v624 = vsel %vm622, %v612, 0.0
        %v625 = vadd.f32 %v597, %v623
        %v626 = vadd.f32 %v598, %v624
        %v627 = vrot.slane %v433, 1
        %v628 = vrot.slane %v434, 1
        %vm629 = vcmp.lt.s32.totalorder %v438, 7
        %v630 = vsel %vm629, %v627, %v628
        %v631 = vsel %vm629, %v628, %v627
        %v632 = vmul.f32 %v631, %v433
        %v633 = vmul.f32 %v630, %v434
        %v634 = vadd.f32 %v632, %v633
        %v635 = vrot.slane %v634, 4
        %v636 = vadd.f32 %v634, %v635
        %v637 = vrot.slane %v636, 2
        %v638 = vadd.f32 %v636, %v637
        %v639 = vrot.slane %v638, 1
        %v640 = vadd.f32 %v638, %v639
        %vm641 = vcmp.eq.s32.totalorder %v438, 7
        %vm642 = vcmp.eq.s32.totalorder %v439, 7
        %vm643 = vcmp.eq.s32.totalorder %v438, 9
        %vm644 = vcmp.eq.s32.totalorder %v439, 9
        %vm645 = vmor %vm641, %vm643
        %vm646 = vmor %vm642, %vm644
        %v647 = vsel %vm645, 1, 0
        %v648 = vsel %vm646, 1, 0
        %vm649 = vcmp.eq.s32.totalorder %v647, 1
        %vm650 = vcmp.eq.s32.totalorder %v648, 1
        %v651 = vsel %vm649, %v640, 0.0
        %v652 = vsel %vm650, %v640, 0.0
        %v653 = vadd.f32 %v625, %v651
        %v654 = vadd.f32 %v626, %v652
        %v655 = vmul.f32 %v434, %v433
        %v656 = vadd.f32 %v655, %v655
        %v657 = vrot.slane %v656, 4
        %v658 = vadd.f32 %v656, %v657
        %v659 = vrot.slane %v658, 2
        %v660 = vadd.f32 %v658, %v659
        %v661 = vrot.slane %v660, 1
        %v662 = vadd.f32 %v660, %v661
        %vm663 = vcmp.eq.s32.totalorder %v438, 8
        %vm664 = vcmp.eq.s32.totalorder %v439, 8
        %v665 = vsel %vm663, 1, 0
        %v666 = vsel %vm664, 1, 0
        %vm667 = vcmp.eq.s32.totalorder %v665, 1
        %vm668 = vcmp.eq.s32.totalorder %v666, 1
        %v669 = vsel %vm667, %v662, 0.0
        %v670 = vsel %vm668, %v662, 0.0
        %v671 = vadd.f32 %v653, %v669
        %v672 = vadd.f32 %v654, %v670
        %673 = vmax.xlane.f32.xlu0 %v671
        %v674 = vpop.xlane.xlu0 %673
        %675 = vmax.xlane.f32.xlu0 %v672
        %v676 = vpop.xlane.xlu0 %675
        %v677 = vsub.f32 %v671, %v674
        %v678 = vsub.f32 %v672, %v676
        %v679 = vmul.f32 %v677, 1.442695
        %v680 = vpow.pop %v679
        %v681 = vmul.f32 %v678, 1.442695
        %v682 = vpow.pop %v681
        %v683 = vld [vmem:[%s5] sm:$0xff]
        %v684 = vld [vmem:[%s5 + $0x8] sm:$0xff]
        %v685 = vld [vmem:[%s5 + $0x10] sm:$0xff]
        %v686 = vld [vmem:[%s5 + $0x18] sm:$0xff]
        %v687 = vld [vmem:[%s5 + $0x20] sm:$0xff]
        %v688 = vld [vmem:[%s5 + $0x28] sm:$0xff]
        %v689 = vld [vmem:[%s5 + $0x30] sm:$0xff]
        %v690 = vld [vmem:[%s5 + $0x38] sm:$0xff]
        %v691 = vld [vmem:[%s5 + $0x40] sm:$0xff]
        %v692 = vld [vmem:[%s5 + $0x48] sm:$0xff]
        %v693 = vld [vmem:[%s5 + $0x50] sm:$0xff]
        %v694 = vld [vmem:[%s5 + $0x58] sm:$0xff]
        %v695 = vld [vmem:[%s5 + $0x60] sm:$0xff]
        %v696 = vld [vmem:[%s5 + $0x68] sm:$0xff]
        %v697 = vld [vmem:[%s5 + $0x70] sm:$0xff]
        %v698 = vld [vmem:[%s5 + $0x78] sm:$0xff]
        %699 = vmatprep.subr.mxu0 0.0
        %700 = vmatpush1.msra.mxu0 %v698
        %701 = vmatprep.subr.mxu0 0.0
        %702 = vmatpush1.msra.mxu0 %v697
        %703 = vmatprep.subr.mxu0 0.0
        %704 = vmatpush1.msra.mxu0 %v696
        %705 = vmatprep.subr.mxu0 0.0
        %706 = vmatpush1.msra.mxu0 %v695
        %707 = vmatprep.subr.mxu0 0.0
        %708 = vmatpush1.msra.mxu0 %v694
        %709 = vmatprep.subr.mxu0 0.0
        %710 = vmatpush1.msra.mxu0 %v693
        %711 = vmatprep.subr.mxu0 0.0
        %712 = vmatpush1.msra.mxu0 %v692
        %713 = vmatprep.subr.mxu0 0.0
        %714 = vmatpush1.msra.mxu0 %v691
        %715 = vmatprep.subr.mxu0 0.0
        %716 = vmatpush1.msra.mxu0 %v690
        %717 = vmatprep.subr.mxu0 0.0
        %718 = vmatpush1.msra.mxu0 %v689
        %719 = vmatprep.subr.mxu0 0.0
        %720 = vmatpush1.msra.mxu0 %v688
        %721 = vmatprep.subr.mxu0 0.0
        %722 = vmatpush1.msra.mxu0 %v687
        %723 = vmatprep.subr.mxu0 0.0
        %724 = vmatpush1.msra.mxu0 %v686
        %725 = vmatprep.subr.mxu0 0.0
        %726 = vmatpush1.msra.mxu0 %v685
        %727 = vmatprep.subr.mxu0 0.0
        %728 = vmatpush1.msra.mxu0 %v684
        %729 = vmatprep.subr.mxu0 0.0
        %730 = vmatpush1.msra.mxu0 %v683
        %731 = vmatprep.subr.mxu0 0.0
        %732 = vmatpush2.msra.mxu0 0.0
        %733 = vmatprep.subr.mxu0 0.0
        %734 = vmatpush2.msra.mxu0 0.0
        %735 = vmatprep.subr.mxu0 0.0
        %736 = vmatpush2.msra.mxu0 0.0
        %737 = vmatprep.subr.mxu0 0.0
        %738 = vmatpush2.msra.mxu0 0.0
        %739 = vmatprep.subr.mxu0 0.0
        %740 = vmatpush2.msra.mxu0 0.0
        %741 = vmatprep.subr.mxu0 0.0
        %742 = vmatpush2.msra.mxu0 0.0
        %743 = vmatprep.subr.mxu0 0.0
        %744 = vmatpush2.msra.mxu0 0.0
        %745 = vmatprep.subr.mxu0 0.0
        %746 = vmatpush2.msra.mxu0 0.0
        %747 = vmatprep.subr.mxu0 0.0
        %748 = vmatpush2.msra.mxu0 0.0
        %749 = vmatprep.subr.mxu0 0.0
        %750 = vmatpush2.msra.mxu0 0.0
        %751 = vmatprep.subr.mxu0 0.0
        %752 = vmatpush2.msra.mxu0 0.0
        %753 = vmatprep.subr.mxu0 0.0
        %754 = vmatpush2.msra.mxu0 0.0
        %755 = vmatprep.subr.mxu0 0.0
        %756 = vmatpush2.msra.mxu0 0.0
        %757 = vmatprep.subr.mxu0 0.0
        %758 = vmatpush2.msra.mxu0 0.0
        %759 = vmatprep.subr.mxu0 0.0
        %760 = vmatpush2.msra.mxu0 0.0
        %761 = vmatprep.subr.mxu0 0.0
        %762 = vmatpush2.msra.mxu0 0.0
        %763 = vmatprep.mubr.f32.mxu0 0.0
        %764 = vmatmul.mubr.f32.gmra.mxu0 %v680
        %v765 = vpop.f32.mrf.mxu0
        %v766 = vadd.f32 0.0, %v765
        %v767 = vpop.f32.mrf.mxu0
        %768 = vmatprep.mubr.f32.mxu0 0.0
        %769 = vmatmul.mubr.f32.gmra.mxu0 %v682
        %v770 = vpop.f32.mrf.mxu0
        %v771 = vadd.f32 0.0, %v770
        %v772 = vpop.f32.mrf.mxu0
        %773 = vdwg.mxu0
        %v774 = vrcp.pop %v766
        %v775 = vrcp.pop %v771
        %v776 = vmul.f32 %v774, 0.03125
        %v777 = vmul.f32 %v775, 0.03125
        %v778 = vmul.f32 %v433, %v680
        %v779 = vmul.f32 %v434, %v682
        %v780 = vmul.f32 %v778, %v776
        %v781 = vmul.f32 %v779, %v777
        %v782 = vld [vmem:[%s6] sm:$0xff]
        %v783 = vld [vmem:[%s6 + $0x8] sm:$0xff]
        %v784 = vpack.c.bf16 %v781, %v780
        %v785 = vld [vmem:[%s2] sm:$0xf]
        %v786 = vld [vmem:[%s2 + $0x4] sm:$0xf]
        %v787 = vld [vmem:[%s2 + $0x8] sm:$0xf]
        %v788 = vld [vmem:[%s2 + $0xc] sm:$0xf]
        %v789 = vld [vmem:[%s2 + $0x10] sm:$0xf]
        %v790 = vld [vmem:[%s2 + $0x14] sm:$0xf]
        %v791 = vld [vmem:[%s2 + $0x18] sm:$0xf]
        %v792 = vld [vmem:[%s2 + $0x1c] sm:$0xf]
        %v793 = vld [vmem:[%s2 + $0x20] sm:$0xf]
        %v794 = vld [vmem:[%s2 + $0x24] sm:$0xf]
        %v795 = vld [vmem:[%s2 + $0x28] sm:$0xf]
        %v796 = vld [vmem:[%s2 + $0x2c] sm:$0xf]
        %v797 = vld [vmem:[%s2 + $0x30] sm:$0xf]
        %v798 = vld [vmem:[%s2 + $0x34] sm:$0xf]
        %v799 = vld [vmem:[%s2 + $0x38] sm:$0xf]
        %v800 = vld [vmem:[%s2 + $0x3c] sm:$0xf]
        %v801 = vlaneseq
        %v802 = vshrl.u32 %v801, 7
        %v803 = vsub.s32 0, %v802
        %v804 = vrot.slane %v782, %v803
        %v821 = vunpack.c.l.b16 %v785
        %v822 = vunpack.c.l.b16 %v786
        %v823 = vunpack.c.l.b16 %v787
        %v824 = vunpack.c.l.b16 %v788
        %v825 = vunpack.c.l.b16 %v789
        %v826 = vunpack.c.l.b16 %v790
        %v827 = vunpack.c.l.b16 %v791
        %v828 = vunpack.c.l.b16 %v792
        %v829 = vunpack.c.l.b16 %v793
        %v830 = vunpack.c.l.b16 %v794
        %v831 = vunpack.c.l.b16 %v795
        %v832 = vunpack.c.l.b16 %v796
        %v833 = vunpack.c.l.b16 %v797
        %v834 = vunpack.c.l.b16 %v798
        %v835 = vunpack.c.l.b16 %v799
        %v836 = vunpack.c.l.b16 %v800
        %v837 = vpack.c.b16 %v822, %v821
        %v838 = vpack.c.b16 %v824, %v823
        %v839 = vpack.c.b16 %v826, %v825
        %v840 = vpack.c.b16 %v828, %v827
        %v841 = vpack.c.b16 %v830, %v829
        %v842 = vpack.c.b16 %v832, %v831
        %v843 = vpack.c.b16 %v834, %v833
        %v844 = vpack.c.b16 %v836, %v835
        %853 = vmatprep.subr.bf16.mxu0 0
        %854 = vmatpush1.bf16.msra.mxu0 %v844
        %855 = vmatprep.subr.bf16.mxu0 0
        %856 = vmatpush1.bf16.msra.mxu0 %v843
        %857 = vmatprep.subr.bf16.mxu0 0
        %858 = vmatpush1.bf16.msra.mxu0 %v842
        %859 = vmatprep.subr.bf16.mxu0 0
        %860 = vmatpush1.bf16.msra.mxu0 %v841
        %861 = vmatprep.subr.bf16.mxu0 0
        %862 = vmatpush1.bf16.msra.mxu0 %v840
        %863 = vmatprep.subr.bf16.mxu0 0
        %864 = vmatpush1.bf16.msra.mxu0 %v839
        %865 = vmatprep.subr.bf16.mxu0 0
        %866 = vmatpush1.bf16.msra.mxu0 %v838
        %867 = vmatprep.subr.bf16.mxu0 0
        %868 = vmatpush1.bf16.msra.mxu0 %v837
        %869 = vmatprep.subr.bf16.mxu0 0
        %870 = vmatpush2.bf16.msra.mxu0 0
        %871 = vmatprep.subr.bf16.mxu0 0
        %872 = vmatpush2.bf16.msra.mxu0 0
        %873 = vmatprep.subr.bf16.mxu0 0
        %874 = vmatpush2.bf16.msra.mxu0 0
        %875 = vmatprep.subr.bf16.mxu0 0
        %876 = vmatpush2.bf16.msra.mxu0 0
        %877 = vmatprep.subr.bf16.mxu0 0
        %878 = vmatpush2.bf16.msra.mxu0 0
        %879 = vmatprep.subr.bf16.mxu0 0
        %880 = vmatpush2.bf16.msra.mxu0 0
        %881 = vmatprep.subr.bf16.mxu0 0
        %882 = vmatpush2.bf16.msra.mxu0 0
        %883 = vmatprep.subr.bf16.mxu0 0
        %884 = vmatpush2.bf16.msra.mxu0 0
        %885 = vmatprep.mubr.bf16.mxu0 0
        %886 = vmatmul.mubr.bf16.gmra.mxu0 %v784
        %v887 = vpop.f32.mrf.mxu0
        %v888 = vadd.f32 %v804, %v887
        %v889 = vpop.f32.mrf.mxu0
        %v890 = vpop.f32.mrf.mxu0
        %v891 = vadd.f32 %v804, %v890
        %v892 = vpop.f32.mrf.mxu0
        %893 = vdwg.mxu0
        %v894 = vadd.f32 %v433, %v888
        %v895 = vadd.f32 %v434, %v891
        %896 = vmatprep.subr.mxu0 0.0
        %897 = vmatpush1.msra.mxu0 %v698
        %898 = vmatprep.subr.mxu0 0.0
        %899 = vmatpush1.msra.mxu0 %v697
        %900 = vmatprep.subr.mxu0 0.0
        %901 = vmatpush1.msra.mxu0 %v696
        %902 = vmatprep.subr.mxu0 0.0
        %903 = vmatpush1.msra.mxu0 %v695
        %904 = vmatprep.subr.mxu0 0.0
        %905 = vmatpush1.msra.mxu0 %v694
        %906 = vmatprep.subr.mxu0 0.0
        %907 = vmatpush1.msra.mxu0 %v693
        %908 = vmatprep.subr.mxu0 0.0
        %909 = vmatpush1.msra.mxu0 %v692
        %910 = vmatprep.subr.mxu0 0.0
        %911 = vmatpush1.msra.mxu0 %v691
        %912 = vmatprep.subr.mxu0 0.0
        %913 = vmatpush1.msra.mxu0 %v690
        %914 = vmatprep.subr.mxu0 0.0
        %915 = vmatpush1.msra.mxu0 %v689
        %916 = vmatprep.subr.mxu0 0.0
        %917 = vmatpush1.msra.mxu0 %v688
        %918 = vmatprep.subr.mxu0 0.0
        %919 = vmatpush1.msra.mxu0 %v687
        %920 = vmatprep.subr.mxu0 0.0
        %921 = vmatpush1.msra.mxu0 %v686
        %922 = vmatprep.subr.mxu0 0.0
        %923 = vmatpush1.msra.mxu0 %v685
        %924 = vmatprep.subr.mxu0 0.0
        %925 = vmatpush1.msra.mxu0 %v684
        %926 = vmatprep.subr.mxu0 0.0
        %927 = vmatpush1.msra.mxu0 %v683
        %928 = vmatprep.subr.mxu0 0.0
        %929 = vmatpush2.msra.mxu0 0.0
        %930 = vmatprep.subr.mxu0 0.0
        %931 = vmatpush2.msra.mxu0 0.0
        %932 = vmatprep.subr.mxu0 0.0
        %933 = vmatpush2.msra.mxu0 0.0
        %934 = vmatprep.subr.mxu0 0.0
        %935 = vmatpush2.msra.mxu0 0.0
        %936 = vmatprep.subr.mxu0 0.0
        %937 = vmatpush2.msra.mxu0 0.0
        %938 = vmatprep.subr.mxu0 0.0
        %939 = vmatpush2.msra.mxu0 0.0
        %940 = vmatprep.subr.mxu0 0.0
        %941 = vmatpush2.msra.mxu0 0.0
        %942 = vmatprep.subr.mxu0 0.0
        %943 = vmatpush2.msra.mxu0 0.0
        %944 = vmatprep.subr.mxu0 0.0
        %945 = vmatpush2.msra.mxu0 0.0
        %946 = vmatprep.subr.mxu0 0.0
        %947 = vmatpush2.msra.mxu0 0.0
        %948 = vmatprep.subr.mxu0 0.0
        %949 = vmatpush2.msra.mxu0 0.0
        %950 = vmatprep.subr.mxu0 0.0
        %951 = vmatpush2.msra.mxu0 0.0
        %952 = vmatprep.subr.mxu0 0.0
        %953 = vmatpush2.msra.mxu0 0.0
        %954 = vmatprep.subr.mxu0 0.0
        %955 = vmatpush2.msra.mxu0 0.0
        %956 = vmatprep.subr.mxu0 0.0
        %957 = vmatpush2.msra.mxu0 0.0
        %958 = vmatprep.subr.mxu0 0.0
        %959 = vmatpush2.msra.mxu0 0.0
        %960 = vmatprep.mubr.f32.mxu0 0.0
        %961 = vmatmul.mubr.f32.gmra.mxu0 %v894
        %v962 = vpop.f32.mrf.mxu0
        %v963 = vadd.f32 0.0, %v962
        %v964 = vpop.f32.mrf.mxu0
        %965 = vmatprep.mubr.f32.mxu0 0.0
        %966 = vmatmul.mubr.f32.gmra.mxu0 %v895
        %v967 = vpop.f32.mrf.mxu0
        %v968 = vadd.f32 0.0, %v967
        %v969 = vpop.f32.mrf.mxu0
        %970 = vdwg.mxu0
        %v971 = vsub.f32 %v894, %v963
        %v972 = vsub.f32 %v895, %v968
        %v973 = vmul.f32 %v971, %v971
        %v974 = vmul.f32 %v972, %v972
        %975 = vmatprep.subr.mxu0 0.0
        %976 = vmatpush1.msra.mxu0 %v698
        %977 = vmatprep.subr.mxu0 0.0
        %978 = vmatpush1.msra.mxu0 %v697
        %979 = vmatprep.subr.mxu0 0.0
        %980 = vmatpush1.msra.mxu0 %v696
        %981 = vmatprep.subr.mxu0 0.0
        %982 = vmatpush1.msra.mxu0 %v695
        %983 = vmatprep.subr.mxu0 0.0
        %984 = vmatpush1.msra.mxu0 %v694
        %985 = vmatprep.subr.mxu0 0.0
        %986 = vmatpush1.msra.mxu0 %v693
        %987 = vmatprep.subr.mxu0 0.0
        %988 = vmatpush1.msra.mxu0 %v692
        %989 = vmatprep.subr.mxu0 0.0
        %990 = vmatpush1.msra.mxu0 %v691
        %991 = vmatprep.subr.mxu0 0.0
        %992 = vmatpush1.msra.mxu0 %v690
        %993 = vmatprep.subr.mxu0 0.0
        %994 = vmatpush1.msra.mxu0 %v689
        %995 = vmatprep.subr.mxu0 0.0
        %996 = vmatpush1.msra.mxu0 %v688
        %997 = vmatprep.subr.mxu0 0.0
        %998 = vmatpush1.msra.mxu0 %v687
        %999 = vmatprep.subr.mxu0 0.0
        %1000 = vmatpush1.msra.mxu0 %v686
        %1001 = vmatprep.subr.mxu0 0.0
        %1002 = vmatpush1.msra.mxu0 %v685
        %1003 = vmatprep.subr.mxu0 0.0
        %1004 = vmatpush1.msra.mxu0 %v684
        %1005 = vmatprep.subr.mxu0 0.0
        %1006 = vmatpush1.msra.mxu0 %v683
        %1007 = vmatprep.subr.mxu0 0.0
        %1008 = vmatpush2.msra.mxu0 0.0
        %1009 = vmatprep.subr.mxu0 0.0
        %1010 = vmatpush2.msra.mxu0 0.0
        %1011 = vmatprep.subr.mxu0 0.0
        %1012 = vmatpush2.msra.mxu0 0.0
        %1013 = vmatprep.subr.mxu0 0.0
        %1014 = vmatpush2.msra.mxu0 0.0
        %1015 = vmatprep.subr.mxu0 0.0
        %1016 = vmatpush2.msra.mxu0 0.0
        %1017 = vmatprep.subr.mxu0 0.0
        %1018 = vmatpush2.msra.mxu0 0.0
        %1019 = vmatprep.subr.mxu0 0.0
        %1020 = vmatpush2.msra.mxu0 0.0
        %1021 = vmatprep.subr.mxu0 0.0
        %1022 = vmatpush2.msra.mxu0 0.0
        %1023 = vmatprep.subr.mxu0 0.0
        %1024 = vmatpush2.msra.mxu0 0.0
        %1025 = vmatprep.subr.mxu0 0.0
        %1026 = vmatpush2.msra.mxu0 0.0
        %1027 = vmatprep.subr.mxu0 0.0
        %1028 = vmatpush2.msra.mxu0 0.0
        %1029 = vmatprep.subr.mxu0 0.0
        %1030 = vmatpush2.msra.mxu0 0.0
        %1031 = vmatprep.subr.mxu0 0.0
        %1032 = vmatpush2.msra.mxu0 0.0
        %1033 = vmatprep.subr.mxu0 0.0
        %1034 = vmatpush2.msra.mxu0 0.0
        %1035 = vmatprep.subr.mxu0 0.0
        %1036 = vmatpush2.msra.mxu0 0.0
        %1037 = vmatprep.subr.mxu0 0.0
        %1038 = vmatpush2.msra.mxu0 0.0
        %1039 = vmatprep.mubr.f32.mxu0 0.0
        %1040 = vmatmul.mubr.f32.gmra.mxu0 %v973
        %v1041 = vpop.f32.mrf.mxu0
        %v1042 = vadd.f32 1e-05, %v1041
        %v1043 = vpop.f32.mrf.mxu0
        %1044 = vmatprep.mubr.f32.mxu0 0.0
        %1045 = vmatmul.mubr.f32.gmra.mxu0 %v974
        %v1046 = vpop.f32.mrf.mxu0
        %v1047 = vadd.f32 1e-05, %v1046
        %v1048 = vpop.f32.mrf.mxu0
        %1049 = vdwg.mxu0
        %v1050 = vrsqrt.pop %v1042
        %v1051 = vrsqrt.pop %v1047
        %v1052 = vmul.f32 %v971, %v1050
        %v1053 = vmul.f32 %v972, %v1051
        %v1054 = vlaneseq
        %v1055 = vshrl.u32 %v1054, 7
        %v1056 = vsub.s32 3, %v1055
        %v1057 = vrot.slane %v782, %v1056
        %v1058 = vmul.f32 %v1052, %v1057
        %v1059 = vmul.f32 %v1053, %v1057
        %v1060 = vlaneseq
        %v1061 = vshrl.u32 %v1060, 7
        %v1062 = vsub.s32 4, %v1061
        %v1063 = vrot.slane %v782, %v1062
        %v1064 = vadd.f32 %v1058, %v1063
        %v1065 = vadd.f32 %v1059, %v1063
        %v1066 = vpack.c.bf16 %v1065, %v1064
        %v1067 = vld [vmem:[%s3] sm:$0xff]
        %v1068 = vld [vmem:[%s3 + $0x8] sm:$0xff]
        %v1069 = vld [vmem:[%s3 + $0x10] sm:$0xff]
        %v1070 = vld [vmem:[%s3 + $0x18] sm:$0xff]
        %v1071 = vld [vmem:[%s3 + $0x20] sm:$0xff]
        %v1072 = vld [vmem:[%s3 + $0x28] sm:$0xff]
        %v1073 = vld [vmem:[%s3 + $0x30] sm:$0xff]
        %v1074 = vld [vmem:[%s3 + $0x38] sm:$0xff]
        %v1075 = vld [vmem:[%s3 + $0x40] sm:$0xff]
        %v1076 = vld [vmem:[%s3 + $0x48] sm:$0xff]
        %v1077 = vld [vmem:[%s3 + $0x50] sm:$0xff]
        %v1078 = vld [vmem:[%s3 + $0x58] sm:$0xff]
        %v1079 = vld [vmem:[%s3 + $0x60] sm:$0xff]
        %v1080 = vld [vmem:[%s3 + $0x68] sm:$0xff]
        %v1081 = vld [vmem:[%s3 + $0x70] sm:$0xff]
        %v1082 = vld [vmem:[%s3 + $0x78] sm:$0xff]
        %v1083 = vlaneseq
        %v1084 = vshrl.u32 %v1083, 7
        %v1085 = vsub.s32 1, %v1084
        %v1086 = vrot.slane %v782, %v1085
        %v1087 = vlaneseq
        %v1088 = vshrl.u32 %v1087, 7
        %v1089 = vsub.s32 1, %v1088
        %v1090 = vrot.slane %v783, %v1089
        %v1107 = vunpack.c.l.b16 %v1067
        %v1108 = vunpack.c.h.b16 %v1067
        %v1109 = vunpack.c.l.b16 %v1068
        %v1110 = vunpack.c.h.b16 %v1068
        %v1111 = vunpack.c.l.b16 %v1069
        %v1112 = vunpack.c.h.b16 %v1069
        %v1113 = vunpack.c.l.b16 %v1070
        %v1114 = vunpack.c.h.b16 %v1070
        %v1115 = vunpack.c.l.b16 %v1071
        %v1116 = vunpack.c.h.b16 %v1071
        %v1117 = vunpack.c.l.b16 %v1072
        %v1118 = vunpack.c.h.b16 %v1072
        %v1119 = vunpack.c.l.b16 %v1073
        %v1120 = vunpack.c.h.b16 %v1073
        %v1121 = vunpack.c.l.b16 %v1074
        %v1122 = vunpack.c.h.b16 %v1074
        %v1123 = vunpack.c.l.b16 %v1075
        %v1124 = vunpack.c.h.b16 %v1075
        %v1125 = vunpack.c.l.b16 %v1076
        %v1126 = vunpack.c.h.b16 %v1076
        %v1127 = vunpack.c.l.b16 %v1077
        %v1128 = vunpack.c.h.b16 %v1077
        %v1129 = vunpack.c.l.b16 %v1078
        %v1130 = vunpack.c.h.b16 %v1078
        %v1131 = vunpack.c.l.b16 %v1079
        %v1132 = vunpack.c.h.b16 %v1079
        %v1133 = vunpack.c.l.b16 %v1080
        %v1134 = vunpack.c.h.b16 %v1080
        %v1135 = vunpack.c.l.b16 %v1081
        %v1136 = vunpack.c.h.b16 %v1081
        %v1137 = vunpack.c.l.b16 %v1082
        %v1138 = vunpack.c.h.b16 %v1082
        %v1139 = vpack.c.b16 %v1109, %v1107
        %v1140 = vpack.c.b16 %v1110, %v1108
        %v1141 = vpack.c.b16 %v1113, %v1111
        %v1142 = vpack.c.b16 %v1114, %v1112
        %v1143 = vpack.c.b16 %v1117, %v1115
        %v1144 = vpack.c.b16 %v1118, %v1116
        %v1145 = vpack.c.b16 %v1121, %v1119
        %v1146 = vpack.c.b16 %v1122, %v1120
        %v1147 = vpack.c.b16 %v1125, %v1123
        %v1148 = vpack.c.b16 %v1126, %v1124
        %v1149 = vpack.c.b16 %v1129, %v1127
        %v1150 = vpack.c.b16 %v1130, %v1128
        %v1151 = vpack.c.b16 %v1133, %v1131
        %v1152 = vpack.c.b16 %v1134, %v1132
        %v1153 = vpack.c.b16 %v1137, %v1135
        %v1154 = vpack.c.b16 %v1138, %v1136
        %1171 = vmatprep.subr.bf16.mxu0 %v1154
        %1172 = vmatpush1.bf16.msra.mxu0 %v1153
        %1173 = vmatprep.subr.bf16.mxu0 %v1152
        %1174 = vmatpush1.bf16.msra.mxu0 %v1151
        %1175 = vmatprep.subr.bf16.mxu0 %v1150
        %1176 = vmatpush1.bf16.msra.mxu0 %v1149
        %1177 = vmatprep.subr.bf16.mxu0 %v1148
        %1178 = vmatpush1.bf16.msra.mxu0 %v1147
        %1179 = vmatprep.subr.bf16.mxu0 %v1146
        %1180 = vmatpush1.bf16.msra.mxu0 %v1145
        %1181 = vmatprep.subr.bf16.mxu0 %v1144
        %1182 = vmatpush1.bf16.msra.mxu0 %v1143
        %1183 = vmatprep.subr.bf16.mxu0 %v1142
        %1184 = vmatpush1.bf16.msra.mxu0 %v1141
        %1185 = vmatprep.subr.bf16.mxu0 %v1140
        %1186 = vmatpush1.bf16.msra.mxu0 %v1139
        %1187 = vmatprep.subr.bf16.mxu0 0
        %1188 = vmatpush2.bf16.msra.mxu0 0
        %1189 = vmatprep.subr.bf16.mxu0 0
        %1190 = vmatpush2.bf16.msra.mxu0 0
        %1191 = vmatprep.subr.bf16.mxu0 0
        %1192 = vmatpush2.bf16.msra.mxu0 0
        %1193 = vmatprep.subr.bf16.mxu0 0
        %1194 = vmatpush2.bf16.msra.mxu0 0
        %1195 = vmatprep.subr.bf16.mxu0 0
        %1196 = vmatpush2.bf16.msra.mxu0 0
        %1197 = vmatprep.subr.bf16.mxu0 0
        %1198 = vmatpush2.bf16.msra.mxu0 0
        %1199 = vmatprep.subr.bf16.mxu0 0
        %1200 = vmatpush2.bf16.msra.mxu0 0
        %1201 = vmatprep.subr.bf16.mxu0 0
        %1202 = vmatpush2.bf16.msra.mxu0 0
        %1203 = vmatprep.mubr.bf16.mxu0 0
        %1204 = vmatmul.mubr.bf16.gmra.mxu0 %v1066
        %v1205 = vpop.f32.mrf.mxu0
        %v1206 = vadd.f32 %v1086, %v1205
        %v1207 = vpop.f32.mrf.mxu0
        %v1208 = vadd.f32 %v1090, %v1207
        %v1209 = vpop.f32.mrf.mxu0
        %v1210 = vadd.f32 %v1086, %v1209
        %v1211 = vpop.f32.mrf.mxu0
        %v1212 = vadd.f32 %v1090, %v1211
        %1213 = vdwg.mxu0
        %v1214 = vmax.f32 %v1206, 0.0
        %v1215 = vmax.f32 %v1208, 0.0
        %v1216 = vmax.f32 %v1210, 0.0
        %v1217 = vmax.f32 %v1212, 0.0
        %v1218 = vpack.c.bf16 %v1216, %v1214
        %v1219 = vpack.c.bf16 %v1217, %v1215
        %v1220 = vld [vmem:[%s4] sm:$0xf]
        %v1221 = vld [vmem:[%s4 + $0x4] sm:$0xf]
        %v1222 = vld [vmem:[%s4 + $0x8] sm:$0xf]
        %v1223 = vld [vmem:[%s4 + $0xc] sm:$0xf]
        %v1224 = vld [vmem:[%s4 + $0x10] sm:$0xf]
        %v1225 = vld [vmem:[%s4 + $0x14] sm:$0xf]
        %v1226 = vld [vmem:[%s4 + $0x18] sm:$0xf]
        %v1227 = vld [vmem:[%s4 + $0x1c] sm:$0xf]
        %v1228 = vld [vmem:[%s4 + $0x20] sm:$0xf]
        %v1229 = vld [vmem:[%s4 + $0x24] sm:$0xf]
        %v1230 = vld [vmem:[%s4 + $0x28] sm:$0xf]
        %v1231 = vld [vmem:[%s4 + $0x2c] sm:$0xf]
        %v1232 = vld [vmem:[%s4 + $0x30] sm:$0xf]
        %v1233 = vld [vmem:[%s4 + $0x34] sm:$0xf]
        %v1234 = vld [vmem:[%s4 + $0x38] sm:$0xf]
        %v1235 = vld [vmem:[%s4 + $0x3c] sm:$0xf]
        %v1236 = vld [vmem:[%s4 + $0x40] sm:$0xf]
        %v1237 = vld [vmem:[%s4 + $0x44] sm:$0xf]
        %v1238 = vld [vmem:[%s4 + $0x48] sm:$0xf]
        %v1239 = vld [vmem:[%s4 + $0x4c] sm:$0xf]
        %v1240 = vld [vmem:[%s4 + $0x50] sm:$0xf]
        %v1241 = vld [vmem:[%s4 + $0x54] sm:$0xf]
        %v1242 = vld [vmem:[%s4 + $0x58] sm:$0xf]
        %v1243 = vld [vmem:[%s4 + $0x5c] sm:$0xf]
        %v1244 = vld [vmem:[%s4 + $0x60] sm:$0xf]
        %v1245 = vld [vmem:[%s4 + $0x64] sm:$0xf]
        %v1246 = vld [vmem:[%s4 + $0x68] sm:$0xf]
        %v1247 = vld [vmem:[%s4 + $0x6c] sm:$0xf]
        %v1248 = vld [vmem:[%s4 + $0x70] sm:$0xf]
        %v1249 = vld [vmem:[%s4 + $0x74] sm:$0xf]
        %v1250 = vld [vmem:[%s4 + $0x78] sm:$0xf]
        %v1251 = vld [vmem:[%s4 + $0x7c] sm:$0xf]
        %v1252 = vlaneseq
        %v1253 = vshrl.u32 %v1252, 7
        %v1254 = vsub.s32 2, %v1253
        %v1255 = vrot.slane %v782, %v1254
        %v1288 = vunpack.c.l.b16 %v1220
        %v1289 = vunpack.c.l.b16 %v1221
        %v1290 = vunpack.c.l.b16 %v1222
        %v1291 = vunpack.c.l.b16 %v1223
        %v1292 = vunpack.c.l.b16 %v1224
        %v1293 = vunpack.c.l.b16 %v1225
        %v1294 = vunpack.c.l.b16 %v1226
        %v1295 = vunpack.c.l.b16 %v1227
        %v1296 = vunpack.c.l.b16 %v1228
        %v1297 = vunpack.c.l.b16 %v1229
        %v1298 = vunpack.c.l.b16 %v1230
        %v1299 = vunpack.c.l.b16 %v1231
        %v1300 = vunpack.c.l.b16 %v1232
        %v1301 = vunpack.c.l.b16 %v1233
        %v1302 = vunpack.c.l.b16 %v1234
        %v1303 = vunpack.c.l.b16 %v1235
        %v1304 = vunpack.c.l.b16 %v1236
        %v1305 = vunpack.c.l.b16 %v1237
        %v1306 = vunpack.c.l.b16 %v1238
        %v1307 = vunpack.c.l.b16 %v1239
        %v1308 = vunpack.c.l.b16 %v1240
        %v1309 = vunpack.c.l.b16 %v1241
        %v1310 = vunpack.c.l.b16 %v1242
        %v1311 = vunpack.c.l.b16 %v1243
        %v1312 = vunpack.c.l.b16 %v1244
        %v1313 = vunpack.c.l.b16 %v1245
        %v1314 = vunpack.c.l.b16 %v1246
        %v1315 = vunpack.c.l.b16 %v1247
        %v1316 = vunpack.c.l.b16 %v1248
        %v1317 = vunpack.c.l.b16 %v1249
        %v1318 = vunpack.c.l.b16 %v1250
        %v1319 = vunpack.c.l.b16 %v1251
        %v1320 = vpack.c.b16 %v1289, %v1288
        %v1321 = vpack.c.b16 %v1291, %v1290
        %v1322 = vpack.c.b16 %v1293, %v1292
        %v1323 = vpack.c.b16 %v1295, %v1294
        %v1324 = vpack.c.b16 %v1297, %v1296
        %v1325 = vpack.c.b16 %v1299, %v1298
        %v1326 = vpack.c.b16 %v1301, %v1300
        %v1327 = vpack.c.b16 %v1303, %v1302
        %v1328 = vpack.c.b16 %v1305, %v1304
        %v1329 = vpack.c.b16 %v1307, %v1306
        %v1330 = vpack.c.b16 %v1309, %v1308
        %v1331 = vpack.c.b16 %v1311, %v1310
        %v1332 = vpack.c.b16 %v1313, %v1312
        %v1333 = vpack.c.b16 %v1315, %v1314
        %v1334 = vpack.c.b16 %v1317, %v1316
        %v1335 = vpack.c.b16 %v1319, %v1318
        %1352 = vmatprep.subr.bf16.mxu0 0
        %1353 = vmatpush1.bf16.msra.mxu0 %v1327
        %1354 = vmatprep.subr.bf16.mxu0 0
        %1355 = vmatpush1.bf16.msra.mxu0 %v1326
        %1356 = vmatprep.subr.bf16.mxu0 0
        %1357 = vmatpush1.bf16.msra.mxu0 %v1325
        %1358 = vmatprep.subr.bf16.mxu0 0
        %1359 = vmatpush1.bf16.msra.mxu0 %v1324
        %1360 = vmatprep.subr.bf16.mxu0 0
        %1361 = vmatpush1.bf16.msra.mxu0 %v1323
        %1362 = vmatprep.subr.bf16.mxu0 0
        %1363 = vmatpush1.bf16.msra.mxu0 %v1322
        %1364 = vmatprep.subr.bf16.mxu0 0
        %1365 = vmatpush1.bf16.msra.mxu0 %v1321
        %1366 = vmatprep.subr.bf16.mxu0 0
        %1367 = vmatpush1.bf16.msra.mxu0 %v1320
        %1368 = vmatprep.subr.bf16.mxu0 0
        %1369 = vmatpush2.bf16.msra.mxu0 %v1335
        %1370 = vmatprep.subr.bf16.mxu0 0
        %1371 = vmatpush2.bf16.msra.mxu0 %v1334
        %1372 = vmatprep.subr.bf16.mxu0 0
        %1373 = vmatpush2.bf16.msra.mxu0 %v1333
        %1374 = vmatprep.subr.bf16.mxu0 0
        %1375 = vmatpush2.bf16.msra.mxu0 %v1332
        %1376 = vmatprep.subr.bf16.mxu0 0
        %1377 = vmatpush2.bf16.msra.mxu0 %v1331
        %1378 = vmatprep.subr.bf16.mxu0 0
        %1379 = vmatpush2.bf16.msra.mxu0 %v1330
        %1380 = vmatprep.subr.bf16.mxu0 0
        %1381 = vmatpush2.bf16.msra.mxu0 %v1329
        %1382 = vmatprep.subr.bf16.mxu0 0
        %1383 = vmatpush2.bf16.msra.mxu0 %v1328
        %1384 = vmatprep.mubr.bf16.mxu0 %v1219
        %1385 = vmatmul.mubr.bf16.gmra.mxu0 %v1218
        %v1386 = vpop.f32.mrf.mxu0
        %v1387 = vadd.f32 %v1255, %v1386
        %v1388 = vpop.f32.mrf.mxu0
        %v1389 = vpop.f32.mrf.mxu0
        %v1390 = vadd.f32 %v1255, %v1389
        %v1391 = vpop.f32.mrf.mxu0
        %1392 = vdwg.mxu0
        %v1393 = vadd.f32 %v1064, %v1387
        %v1394 = vadd.f32 %v1065, %v1390
        %1395 = vmatprep.subr.mxu0 0.0
        %1396 = vmatpush1.msra.mxu0 %v698
        %1397 = vmatprep.subr.mxu0 0.0
        %1398 = vmatpush1.msra.mxu0 %v697
        %1399 = vmatprep.subr.mxu0 0.0
        %1400 = vmatpush1.msra.mxu0 %v696
        %1401 = vmatprep.subr.mxu0 0.0
        %1402 = vmatpush1.msra.mxu0 %v695
        %1403 = vmatprep.subr.mxu0 0.0
        %1404 = vmatpush1.msra.mxu0 %v694
        %1405 = vmatprep.subr.mxu0 0.0
        %1406 = vmatpush1.msra.mxu0 %v693
        %1407 = vmatprep.subr.mxu0 0.0
        %1408 = vmatpush1.msra.mxu0 %v692
        %1409 = vmatprep.subr.mxu0 0.0
        %1410 = vmatpush1.msra.mxu0 %v691
        %1411 = vmatprep.subr.mxu0 0.0
        %1412 = vmatpush1.msra.mxu0 %v690
        %1413 = vmatprep.subr.mxu0 0.0
        %1414 = vmatpush1.msra.mxu0 %v689
        %1415 = vmatprep.subr.mxu0 0.0
        %1416 = vmatpush1.msra.mxu0 %v688
        %1417 = vmatprep.subr.mxu0 0.0
        %1418 = vmatpush1.msra.mxu0 %v687
        %1419 = vmatprep.subr.mxu0 0.0
        %1420 = vmatpush1.msra.mxu0 %v686
        %1421 = vmatprep.subr.mxu0 0.0
        %1422 = vmatpush1.msra.mxu0 %v685
        %1423 = vmatprep.subr.mxu0 0.0
        %1424 = vmatpush1.msra.mxu0 %v684
        %1425 = vmatprep.subr.mxu0 0.0
        %1426 = vmatpush1.msra.mxu0 %v683
        %1427 = vmatprep.subr.mxu0 0.0
        %1428 = vmatpush2.msra.mxu0 0.0
        %1429 = vmatprep.subr.mxu0 0.0
        %1430 = vmatpush2.msra.mxu0 0.0
        %1431 = vmatprep.subr.mxu0 0.0
        %1432 = vmatpush2.msra.mxu0 0.0
        %1433 = vmatprep.subr.mxu0 0.0
        %1434 = vmatpush2.msra.mxu0 0.0
        %1435 = vmatprep.subr.mxu0 0.0
        %1436 = vmatpush2.msra.mxu0 0.0
        %1437 = vmatprep.subr.mxu0 0.0
        %1438 = vmatpush2.msra.mxu0 0.0
        %1439 = vmatprep.subr.mxu0 0.0
        %1440 = vmatpush2.msra.mxu0 0.0
        %1441 = vmatprep.subr.mxu0 0.0
        %1442 = vmatpush2.msra.mxu0 0.0
        %1443 = vmatprep.subr.mxu0 0.0
        %1444 = vmatpush2.msra.mxu0 0.0
        %1445 = vmatprep.subr.mxu0 0.0
        %1446 = vmatpush2.msra.mxu0 0.0
        %1447 = vmatprep.subr.mxu0 0.0
        %1448 = vmatpush2.msra.mxu0 0.0
        %1449 = vmatprep.subr.mxu0 0.0
        %1450 = vmatpush2.msra.mxu0 0.0
        %1451 = vmatprep.subr.mxu0 0.0
        %1452 = vmatpush2.msra.mxu0 0.0
        %1453 = vmatprep.subr.mxu0 0.0
        %1454 = vmatpush2.msra.mxu0 0.0
        %1455 = vmatprep.subr.mxu0 0.0
        %1456 = vmatpush2.msra.mxu0 0.0
        %1457 = vmatprep.subr.mxu0 0.0
        %1458 = vmatpush2.msra.mxu0 0.0
        %1459 = vmatprep.mubr.f32.mxu0 0.0
        %1460 = vmatmul.mubr.f32.gmra.mxu0 %v1393
        %v1461 = vpop.f32.mrf.mxu0
        %v1462 = vadd.f32 0.0, %v1461
        %v1463 = vpop.f32.mrf.mxu0
        %1464 = vmatprep.mubr.f32.mxu0 0.0
        %1465 = vmatmul.mubr.f32.gmra.mxu0 %v1394
        %v1466 = vpop.f32.mrf.mxu0
        %v1467 = vadd.f32 0.0, %v1466
        %v1468 = vpop.f32.mrf.mxu0
        %1469 = vdwg.mxu0
        %v1470 = vsub.f32 %v1393, %v1462
        %v1471 = vsub.f32 %v1394, %v1467
        %v1472 = vmul.f32 %v1470, %v1470
        %v1473 = vmul.f32 %v1471, %v1471
        %1474 = vmatprep.subr.mxu0 0.0
        %1475 = vmatpush1.msra.mxu0 %v698
        %1476 = vmatprep.subr.mxu0 0.0
        %1477 = vmatpush1.msra.mxu0 %v697
        %1478 = vmatprep.subr.mxu0 0.0
        %1479 = vmatpush1.msra.mxu0 %v696
        %1480 = vmatprep.subr.mxu0 0.0
        %1481 = vmatpush1.msra.mxu0 %v695
        %1482 = vmatprep.subr.mxu0 0.0
        %1483 = vmatpush1.msra.mxu0 %v694
        %1484 = vmatprep.subr.mxu0 0.0
        %1485 = vmatpush1.msra.mxu0 %v693
        %1486 = vmatprep.subr.mxu0 0.0
        %1487 = vmatpush1.msra.mxu0 %v692
        %1488 = vmatprep.subr.mxu0 0.0
        %1489 = vmatpush1.msra.mxu0 %v691
        %1490 = vmatprep.subr.mxu0 0.0
        %1491 = vmatpush1.msra.mxu0 %v690
        %1492 = vmatprep.subr.mxu0 0.0
        %1493 = vmatpush1.msra.mxu0 %v689
        %1494 = vmatprep.subr.mxu0 0.0
        %1495 = vmatpush1.msra.mxu0 %v688
        %1496 = vmatprep.subr.mxu0 0.0
        %1497 = vmatpush1.msra.mxu0 %v687
        %1498 = vmatprep.subr.mxu0 0.0
        %1499 = vmatpush1.msra.mxu0 %v686
        %1500 = vmatprep.subr.mxu0 0.0
        %1501 = vmatpush1.msra.mxu0 %v685
        %1502 = vmatprep.subr.mxu0 0.0
        %1503 = vmatpush1.msra.mxu0 %v684
        %1504 = vmatprep.subr.mxu0 0.0
        %1505 = vmatpush1.msra.mxu0 %v683
        %1506 = vmatprep.subr.mxu0 0.0
        %1507 = vmatpush2.msra.mxu0 0.0
        %1508 = vmatprep.subr.mxu0 0.0
        %1509 = vmatpush2.msra.mxu0 0.0
        %1510 = vmatprep.subr.mxu0 0.0
        %1511 = vmatpush2.msra.mxu0 0.0
        %1512 = vmatprep.subr.mxu0 0.0
        %1513 = vmatpush2.msra.mxu0 0.0
        %1514 = vmatprep.subr.mxu0 0.0
        %1515 = vmatpush2.msra.mxu0 0.0
        %1516 = vmatprep.subr.mxu0 0.0
        %1517 = vmatpush2.msra.mxu0 0.0
        %1518 = vmatprep.subr.mxu0 0.0
        %1519 = vmatpush2.msra.mxu0 0.0
        %1520 = vmatprep.subr.mxu0 0.0
        %1521 = vmatpush2.msra.mxu0 0.0
        %1522 = vmatprep.subr.mxu0 0.0
        %1523 = vmatpush2.msra.mxu0 0.0
        %1524 = vmatprep.subr.mxu0 0.0
        %1525 = vmatpush2.msra.mxu0 0.0
        %1526 = vmatprep.subr.mxu0 0.0
        %1527 = vmatpush2.msra.mxu0 0.0
        %1528 = vmatprep.subr.mxu0 0.0
        %1529 = vmatpush2.msra.mxu0 0.0
        %1530 = vmatprep.subr.mxu0 0.0
        %1531 = vmatpush2.msra.mxu0 0.0
        %1532 = vmatprep.subr.mxu0 0.0
        %1533 = vmatpush2.msra.mxu0 0.0
        %1534 = vmatprep.subr.mxu0 0.0
        %1535 = vmatpush2.msra.mxu0 0.0
        %1536 = vmatprep.subr.mxu0 0.0
        %1537 = vmatpush2.msra.mxu0 0.0
        %1538 = vmatprep.mubr.f32.mxu0 0.0
        %1539 = vmatmul.mubr.f32.gmra.mxu0 %v1472
        %v1540 = vpop.f32.mrf.mxu0
        %v1541 = vadd.f32 1e-05, %v1540
        %v1542 = vpop.f32.mrf.mxu0
        %1543 = vmatprep.mubr.f32.mxu0 0.0
        %1544 = vmatmul.mubr.f32.gmra.mxu0 %v1473
        %v1545 = vpop.f32.mrf.mxu0
        %v1546 = vadd.f32 1e-05, %v1545
        %v1547 = vpop.f32.mrf.mxu0
        %1548 = vdwg.mxu0
        %v1549 = vrsqrt.pop %v1541
        %v1550 = vrsqrt.pop %v1546
        %v1551 = vmul.f32 %v1470, %v1549
        %v1552 = vmul.f32 %v1471, %v1550
        %v1553 = vlaneseq
        %v1554 = vshrl.u32 %v1553, 7
        %v1555 = vsub.s32 5, %v1554
        %v1556 = vrot.slane %v782, %v1555
        %v1557 = vmul.f32 %v1551, %v1556
        %v1558 = vmul.f32 %v1552, %v1556
        %v1559 = vlaneseq
        %v1560 = vshrl.u32 %v1559, 7
        %v1561 = vsub.s32 6, %v1560
        %v1562 = vrot.slane %v782, %v1561
        %v1563 = vadd.f32 %v1557, %v1562
        %v1564 = vadd.f32 %v1558, %v1562
        %1565 = vst [vmem:[%s339] sm:$0xff] %v1563
        %1566 = vst [vmem:[%s339 + $0x8] sm:$0xff] %v1564
        %s1567 = sand.u32 %s180, 1
        %s1568 = sand.u32 %s180, 1
        %s1569 = smul.addr %s1568, 16
        %s1570 = scalar_lea.vmem [#allocation3], %s1569
        %s1571 = sand.u32 %s206, 1
        %s1572 = sand.u32 %s206, 1
        %s1573 = smul.addr %s1572, 16
        %s1574 = scalar_lea.vmem [#allocation4], %s1573
        // Predicated region
        $region87: #{encoder_layer_forward.1} parent=81 // pred_check
          %p1575 = pneg %p190
        $region88: #{encoder_layer_forward.1} parent=81 // pred_check_branch
          %1577 = sbr.rel (%p1575) target = $region90
        $region89: #{encoder_layer_forward.1} parent=81 // pred_region
          %s1578 = smul.addr %s20, 8
          %s1579 = scalar_lea.vmem %s7, %s1578
          // Predicated region
          $region91: #{encoder_layer_forward.1} parent=89 // pred_check
            _
          $region92: #{encoder_layer_forward.1} parent=89 // pred_check_branch
            %1581 = sbr.rel (0) target = $region94
          $region93: #{encoder_layer_forward.1} parent=89 // pred_region
            // Predicated region
            $region95: #{encoder_layer_forward.1} parent=93 // pred_check
              _
            $region96: #{encoder_layer_forward.1} parent=93 // pred_check_branch
              %1583 = sbr.rel (0) target = $region98
            $region97: #{encoder_layer_forward.1} parent=93 // pred_region
              // Predicated region
              $region110: #{encoder_layer_forward.1} parent=97 // pred_check
                _
              $region111: #{encoder_layer_forward.1} parent=97 // pred_check_branch
                %1601 = sbr.rel (0) target = $region113
              $region112: #{encoder_layer_forward.1} parent=97 // pred_region
                loop: start=0, step=1, limit=1
                $region114: #{encoder_layer_forward.1} parent=112 // loop_pre_header
                  _
                $region115: #{encoder_layer_forward.1} parent=112 // loop_header
                  %s1603 = sphi 0, %s1607
                  %p1604 = scmp.ge.s32.totalorder %s1603, 1
                  %s1608 = sphi %s1570, %s1570
                  %s1609 = sphi %s1579, %s1579
                $region116: #{encoder_layer_forward.1} parent=112 // loop_header_branch
                  %1606 = sbr.rel (%p1604) target = $region120
                $region117: #{encoder_layer_forward.1} parent=112 // loop_body
                  %v1610 = vld [vmem:[%s1608] sm:$0xff]
                  %1611 = vst [vmem:[%s1609] sm:$0xff] %v1610
                  %v1612 = vld [vmem:[%s1608 + $0x8] sm:$0xff]
                  %1613 = vst [vmem:[%s1609 + $0x10] sm:$0xff] %v1612
                $region118: #{encoder_layer_forward.1} parent=112 // loop_footer
                  %s1607 = sadd.s32 1, %s1603
                $region119: #{encoder_layer_forward.1} parent=112 // loop_footer_branch
                  %1602 = sbr.rel target = $region115
                $region120: #{encoder_layer_forward.1} parent=112 // loop_exit
                  _
              $region113: #{encoder_layer_forward.1} parent=97 // pred_fallthru
                _
              // Predicated region
              $region121: #{encoder_layer_forward.1} parent=97 // pred_check
                _
              $region122: #{encoder_layer_forward.1} parent=97 // pred_check_branch
                %1615 = sbr.rel target = $region124
              $region123: #{encoder_layer_forward.1} parent=97 // pred_region
                _
              $region124: #{encoder_layer_forward.1} parent=97 // pred_fallthru
                _
            $region98: #{encoder_layer_forward.1} parent=93 // pred_fallthru
              _
            // Predicated region
            $region99: #{encoder_layer_forward.1} parent=93 // pred_check
              _
            $region100: #{encoder_layer_forward.1} parent=93 // pred_check_branch
              %1585 = sbr.rel target = $region102
            $region101: #{encoder_layer_forward.1} parent=93 // pred_region
              %s1587 = ssub.s32 256, 1
              loop: start=0, step=1, limit=1
              $region103: #{encoder_layer_forward.1} parent=101 // loop_pre_header
                _
              $region104: #{encoder_layer_forward.1} parent=101 // loop_header
                %s1589 = sphi 0, %s1593
                %p1590 = scmp.ge.s32.totalorder %s1589, 1
                %s1594 = sphi %s1570, %s1570
                %s1595 = sphi %s1579, %s1579
              $region105: #{encoder_layer_forward.1} parent=101 // loop_header_branch
                %1592 = sbr.rel (%p1590) target = $region109
              $region106: #{encoder_layer_forward.1} parent=101 // loop_body
                %v1596 = vld [vmem:[%s1594] sm:%s1587]
                %1597 = vst [vmem:[%s1595] sm:%s1587] %v1596
                %v1598 = vld [vmem:[%s1594 + $0x8] sm:%s1587]
                %1599 = vst [vmem:[%s1595 + $0x10] sm:%s1587] %v1598
              $region107: #{encoder_layer_forward.1} parent=101 // loop_footer
                %s1593 = sadd.s32 1, %s1589
              $region108: #{encoder_layer_forward.1} parent=101 // loop_footer_branch
                %1588 = sbr.rel target = $region104
              $region109: #{encoder_layer_forward.1} parent=101 // loop_exit
                _
            $region102: #{encoder_layer_forward.1} parent=93 // pred_fallthru
              _
          $region94: #{encoder_layer_forward.1} parent=89 // pred_fallthru
            _
          %1616 = vnop
        $region90: #{encoder_layer_forward.1} parent=81 // pred_fallthru
          _
        // Predicated region
        $region125: #{encoder_layer_forward.1} parent=81 // pred_check
          %p1617 = pneg %p216
        $region126: #{encoder_layer_forward.1} parent=81 // pred_check_branch
          %1619 = sbr.rel (%p1617) target = $region128
        $region127: #{encoder_layer_forward.1} parent=81 // pred_region
          %s1620 = smul.addr %s20, 8
          %s1621 = scalar_lea.vmem %s8, %s1620
          // Predicated region
          $region129: #{encoder_layer_forward.1} parent=127 // pred_check
            _
          $region130: #{encoder_layer_forward.1} parent=127 // pred_check_branch
            %1623 = sbr.rel (0) target = $region132
          $region131: #{encoder_layer_forward.1} parent=127 // pred_region
            // Predicated region
            $region133: #{encoder_layer_forward.1} parent=131 // pred_check
              _
            $region134: #{encoder_layer_forward.1} parent=131 // pred_check_branch
              %1625 = sbr.rel (0) target = $region136
            $region135: #{encoder_layer_forward.1} parent=131 // pred_region
              // Predicated region
              $region148: #{encoder_layer_forward.1} parent=135 // pred_check
                _
              $region149: #{encoder_layer_forward.1} parent=135 // pred_check_branch
                %1643 = sbr.rel (0) target = $region151
              $region150: #{encoder_layer_forward.1} parent=135 // pred_region
                loop: start=0, step=1, limit=1
                $region152: #{encoder_layer_forward.1} parent=150 // loop_pre_header
                  _
                $region153: #{encoder_layer_forward.1} parent=150 // loop_header
                  %s1645 = sphi 0, %s1649
                  %p1646 = scmp.ge.s32.totalorder %s1645, 1
                  %s1650 = sphi %s1574, %s1574
                  %s1651 = sphi %s1621, %s1621
                $region154: #{encoder_layer_forward.1} parent=150 // loop_header_branch
                  %1648 = sbr.rel (%p1646) target = $region158
                $region155: #{encoder_layer_forward.1} parent=150 // loop_body
                  %v1652 = vld [vmem:[%s1650] sm:$0xff]
                  %1653 = vst [vmem:[%s1651] sm:$0xff] %v1652
                  %v1654 = vld [vmem:[%s1650 + $0x8] sm:$0xff]
                  %1655 = vst [vmem:[%s1651 + $0x10] sm:$0xff] %v1654
                $region156: #{encoder_layer_forward.1} parent=150 // loop_footer
                  %s1649 = sadd.s32 1, %s1645
                $region157: #{encoder_layer_forward.1} parent=150 // loop_footer_branch
                  %1644 = sbr.rel target = $region153
                $region158: #{encoder_layer_forward.1} parent=150 // loop_exit
                  _
              $region151: #{encoder_layer_forward.1} parent=135 // pred_fallthru
                _
              // Predicated region
              $region159: #{encoder_layer_forward.1} parent=135 // pred_check
                _
              $region160: #{encoder_layer_forward.1} parent=135 // pred_check_branch
                %1657 = sbr.rel target = $region162
              $region161: #{encoder_layer_forward.1} parent=135 // pred_region
                _
              $region162: #{encoder_layer_forward.1} parent=135 // pred_fallthru
                _
            $region136: #{encoder_layer_forward.1} parent=131 // pred_fallthru
              _
            // Predicated region
            $region137: #{encoder_layer_forward.1} parent=131 // pred_check
              _
            $region138: #{encoder_layer_forward.1} parent=131 // pred_check_branch
              %1627 = sbr.rel target = $region140
            $region139: #{encoder_layer_forward.1} parent=131 // pred_region
              %s1629 = ssub.s32 256, 1
              loop: start=0, step=1, limit=1
              $region141: #{encoder_layer_forward.1} parent=139 // loop_pre_header
                _
              $region142: #{encoder_layer_forward.1} parent=139 // loop_header
                %s1631 = sphi 0, %s1635
                %p1632 = scmp.ge.s32.totalorder %s1631, 1
                %s1636 = sphi %s1574, %s1574
                %s1637 = sphi %s1621, %s1621
              $region143: #{encoder_layer_forward.1} parent=139 // loop_header_branch
                %1634 = sbr.rel (%p1632) target = $region147
              $region144: #{encoder_layer_forward.1} parent=139 // loop_body
                %v1638 = vld [vmem:[%s1636] sm:%s1629]
                %1639 = vst [vmem:[%s1637] sm:%s1629] %v1638
                %v1640 = vld [vmem:[%s1636 + $0x8] sm:%s1629]
                %1641 = vst [vmem:[%s1637 + $0x10] sm:%s1629] %v1640
              $region145: #{encoder_layer_forward.1} parent=139 // loop_footer
                %s1635 = sadd.s32 1, %s1631
              $region146: #{encoder_layer_forward.1} parent=139 // loop_footer_branch
                %1630 = sbr.rel target = $region142
              $region147: #{encoder_layer_forward.1} parent=139 // loop_exit
                _
            $region140: #{encoder_layer_forward.1} parent=131 // pred_fallthru
              _
          $region132: #{encoder_layer_forward.1} parent=127 // pred_fallthru
            _
          %1658 = vnop
        $region128: #{encoder_layer_forward.1} parent=81 // pred_fallthru
          _
      $region82: #{encoder_layer_forward.1} parent=5 // pred_fallthru
        _
      %p1659 = scmp.le.s32.totalorder 2, %s15
      // Predicated region
      $region163: #{encoder_layer_forward.1} parent=5 // pred_check
        %p1660 = pneg %p1659
      $region164: #{encoder_layer_forward.1} parent=5 // pred_check_branch
        %1662 = sbr.rel (%p1660) target = $region166
      $region165: #{encoder_layer_forward.1} parent=5 // pred_region
        %s1663 = ssub.s32 %s15, 2
        // Predicated region
        $region167: #{encoder_layer_forward.1} parent=165 // pred_check
          %p1664 = pneg %p196
        $region168: #{encoder_layer_forward.1} parent=165 // pred_check_branch
          %1666 = sbr.rel (%p1664) target = $region170
        $region169: #{encoder_layer_forward.1} parent=165 // pred_region
          %s1667 = sand.u32 %s181, 1
          %s1668 = sand.u32 %s181, 1
          %s1669 = smul.addr %s1668, 16
          %s1670 = scalar_lea.vmem [#allocation3], %s1669
        $region170: #{encoder_layer_forward.1} parent=165 // pred_fallthru
          _
        // Predicated region
        $region171: #{encoder_layer_forward.1} parent=165 // pred_check
          %p1671 = pneg %p222
        $region172: #{encoder_layer_forward.1} parent=165 // pred_check_branch
          %1673 = sbr.rel (%p1671) target = $region174
        $region173: #{encoder_layer_forward.1} parent=165 // pred_region
          %s1674 = sand.u32 %s207, 1
          %s1675 = sand.u32 %s207, 1
          %s1676 = smul.addr %s1675, 16
          %s1677 = scalar_lea.vmem [#allocation4], %s1676
        $region174: #{encoder_layer_forward.1} parent=165 // pred_fallthru
          _
      $region166: #{encoder_layer_forward.1} parent=5 // pred_fallthru
        _
    $region6: #{encoder_layer_forward.1} parent=1 // loop_footer
      %s19 = sadd.s32 1, %s15
    $region7: #{encoder_layer_forward.1} parent=1 // loop_footer_branch
      %14 = sbr.rel target = $region3
    $region8: #{encoder_layer_forward.1} parent=1 // loop_exit
      _

</llo_original>
